<compile_context>
chip_gen: v5e
topology: v5e:2x2
jax: 0.10.0
libtpu: 0.0.40
codegen_flags: <defaults>
</compile_context>

<pallas_src>
import functools

import jax
import jax.numpy as jnp
from jax.experimental import pallas as pl
from jax.experimental.pallas import tpu as pltpu


_VMEM_LIMIT = 48 * 1024 * 1024   # above v6e default (32 MiB), below v7x physical (64 MiB)
_LN_EPS = 1e-5                   # PyTorch nn.LayerNorm default


def _fit_tile(total, target):
    """Largest tile <= target that evenly divides `total` (full extent otherwise)."""
    if total <= target:
        return total
    if total % target == 0:
        return target
    return total


# ------------------------------ exact GELU (erf) ------------------------------
def _erf(z):
    # Abramowitz & Stegun 7.1.26 rational approximation, |err| < 1.5e-7.
    # Built only from exp/mul/add/div/where so it lowers cleanly in Mosaic (EUP/VPU).
    a = jnp.abs(z)
    t = 1.0 / (1.0 + 0.3275911 * a)
    poly = t * (0.254829592 + t * (-0.284496736 + t * (1.421413741
             + t * (-1.453152027 + t * 1.061405429))))
    e = 1.0 - poly * jnp.exp(-a * a)
    return jnp.where(z < 0.0, -e, e)


def _gelu_exact(x):
    # PyTorch nn.GELU() default (erf form), not the tanh approximation.
    return 0.5 * x * (1.0 + _erf(x * 0.7071067811865476))


# ---------------- fused [LayerNorm]* -> x @ W.T (+bias) (+GELU) kernel ----------------
def _ln_matmul_kernel(*refs, num_norms, has_bias, apply_gelu, eps):
    # refs layout: x, (gamma, beta) * num_norms, w, [bias], out
    x_ref = refs[0]
    w_idx = 1 + 2 * num_norms
    w_ref = refs[w_idx]
    b_ref = refs[w_idx + 1] if has_bias else None
    o_ref = refs[-1]

    x = x_ref[...].astype(jnp.float32)                      # (tm, K)
    for n in range(num_norms):                              # LN math is VPU/EUP filler under the MXU
        g = refs[1 + 2 * n][...].astype(jnp.float32)        # (1, K)
        be = refs[2 + 2 * n][...].astype(jnp.float32)
        mu = jnp.mean(x, axis=-1, keepdims=True)
        xc = x - mu
        var = jnp.mean(xc * xc, axis=-1, keepdims=True)     # biased variance (PyTorch LN)
        x = xc * jax.lax.rsqrt(var + eps) * g + be

    # Contract against the PyTorch-layout weight (Nout, K) directly: x @ W.T, f32 accumulate.
    acc = jax.lax.dot_general(
        x.astype(x_ref.dtype), w_ref[...],
        dimension_numbers=(((1,), (1,)), ((), ())),
        preferred_element_type=jnp.float32)                 # (tm, tn)
    if has_bias:
        acc = acc + b_ref[...].astype(jnp.float32)
    if apply_gelu:
        acc = _gelu_exact(acc)
    o_ref[...] = acc.astype(o_ref.dtype)


def ln_matmul(x2d, norms, weight, bias=None, apply_gelu=False, *, tm=256, tn=256):
    """out = [optional GELU]( LN_k(...LN_1(x)) @ W.T [+ b] ); W is (Nout, K) PyTorch layout.

    K (= model dim) is kept whole per block because LayerNorm reduces over it.
    """
    M, K = x2d.shape
    Nout, K2 = weight.shape
    assert K2 == K
    tm = _fit_tile(M, tm)
    tn = _fit_tile(Nout, tn)
    num_norms = len(norms)
    has_bias = bias is not None

    in_specs = [pl.BlockSpec((tm, K), lambda i, j: (i, 0))]
    args = [x2d]
    for g, b in norms:
        in_specs += [pl.BlockSpec((1, K), lambda i, j: (0, 0)),
                     pl.BlockSpec((1, K), lambda i, j: (0, 0))]
        args += [g.reshape(1, K), b.reshape(1, K)]
    in_specs.append(pl.BlockSpec((tn, K), lambda i, j: (j, 0)))
    args.append(weight)
    if has_bias:
        in_specs.append(pl.BlockSpec((1, tn), lambda i, j: (0, j)))
        args.append(bias.reshape(1, Nout))

    kernel = functools.partial(_ln_matmul_kernel, num_norms=num_norms,
                               has_bias=has_bias, apply_gelu=apply_gelu, eps=_LN_EPS)
    isz = jnp.dtype(x2d.dtype).itemsize
    cost = pl.CostEstimate(
        flops=2 * M * Nout * K + 10 * M * K * num_norms,
        transcendentals=M * num_norms + (M * Nout if apply_gelu else 0),
        bytes_accessed=isz * (M * K + Nout * K + M * Nout)
                       + 4 * (2 * K * num_norms + (Nout if has_bias else 0)),
    )
    return pl.pallas_call(
        kernel,
        out_shape=jax.ShapeDtypeStruct((M, Nout), x2d.dtype),
        grid_spec=pltpu.PrefetchScalarGridSpec(
            num_scalar_prefetch=0,
            grid=(M // tm, Nout // tn),
            in_specs=in_specs,
            out_specs=pl.BlockSpec((tm, tn), lambda i, j: (i, j)),
        ),
        compiler_params=pltpu.CompilerParams(
            dimension_semantics=("parallel", "parallel"),
            vmem_limit_bytes=_VMEM_LIMIT),
        cost_estimate=cost,
    )(*args)


# -------------- K-tiled matmul: x @ W.T + bias + residual (fused epilogue) --------------
def _matmul_bias_res_kernel(x_ref, w_ref, b_ref, r_ref, o_ref, acc_ref):
    k = pl.program_id(2)

    @pl.when(k == 0)
    def _():
        acc_ref[...] = jnp.zeros_like(acc_ref)

    acc_ref[...] += jax.lax.dot_general(
        x_ref[...], w_ref[...],
        dimension_numbers=(((1,), (1,)), ((), ())),
        preferred_element_type=jnp.float32)

    @pl.when(k == pl.num_programs(2) - 1)
    def _():
        o_ref[...] = (acc_ref[...]
                      + b_ref[...].astype(jnp.float32)
                      + r_ref[...].astype(jnp.float32)).astype(o_ref.dtype)


def matmul_bias_res(x2d, weight, bias, residual, *, tm=256, tn=256, tk=512):
    """out = x @ W.T + bias + residual; W is (Nout, K) PyTorch layout, K tiled + f32 accumulator."""
    M, K = x2d.shape
    Nout, K2 = weight.shape
    assert K2 == K and residual.shape == (M, Nout)
    tm = _fit_tile(M, tm)
    tn = _fit_tile(Nout, tn)
    tk = _fit_tile(K, tk)
    isz = jnp.dtype(x2d.dtype).itemsize
    cost = pl.CostEstimate(
        flops=2 * M * Nout * K, transcendentals=0,
        bytes_accessed=isz * (M * K + Nout * K + 2 * M * Nout + Nout))
    return pl.pallas_call(
        _matmul_bias_res_kernel,
        out_shape=jax.ShapeDtypeStruct((M, Nout), x2d.dtype),
        grid_spec=pltpu.PrefetchScalarGridSpec(
            num_scalar_prefetch=0,
            grid=(M // tm, Nout // tn, K // tk),
            in_specs=[
                pl.BlockSpec((tm, tk), lambda i, j, k: (i, k)),
                pl.BlockSpec((tn, tk), lambda i, j, k: (j, k)),
                pl.BlockSpec((1, tn), lambda i, j, k: (0, j)),
                pl.BlockSpec((tm, tn), lambda i, j, k: (i, j)),
            ],
            out_specs=pl.BlockSpec((tm, tn), lambda i, j, k: (i, j)),
            scratch_shapes=[pltpu.VMEM((tm, tn), jnp.float32)],
        ),
        compiler_params=pltpu.CompilerParams(
            dimension_semantics=("parallel", "parallel", "arbitrary"),
            vmem_limit_bytes=_VMEM_LIMIT),
        cost_estimate=cost,
    )(x2d, weight, bias.reshape(1, Nout), residual)


# -------------------- attention kernel (per batch, heads split in-kernel) --------------------
def _attention_kernel(q_ref, kv_ref, o_ref, *, heads, dim_head, scale):
    # q_ref:  (1, N1, H*d)       -- to_q projection for this batch element
    # kv_ref: (1, N2, 2*H*d)     -- [k | v] concatenated projection for this batch element
    q = q_ref[0].astype(jnp.float32)
    kv = kv_ref[0].astype(jnp.float32)
    inner = heads * dim_head

    outs = []
    for h in range(heads):                                   # static unroll; slices are lane-static
        lo = h * dim_head
        qh = q[:, lo:lo + dim_head] * scale                  # fold softmax scale into q (N1 x d)
        kh = kv[:, lo:lo + dim_head]                         # (N2, d)
        vh = kv[:, inner + lo:inner + lo + dim_head]         # (N2, d)
        s = jax.lax.dot_general(qh, kh,
                                dimension_numbers=(((1,), (1,)), ((), ())),
                                preferred_element_type=jnp.float32)   # (N1, N2)
        s = s - jnp.max(s, axis=-1, keepdims=True)
        p = jnp.exp(s)
        p = p / jnp.sum(p, axis=-1, keepdims=True)
        outs.append(jnp.dot(p, vh, preferred_element_type=jnp.float32))

    o = outs[0] if heads == 1 else jnp.concatenate(outs, axis=-1)     # (N1, H*d), lane-dense store
    o_ref[0] = o.astype(o_ref.dtype)


def attention_pallas(q, kv, heads, dim_head, scale):
    """q: (B, N1, H*d); kv: (B, N2, 2*H*d) -> (B, N1, H*d). Head split is done in-kernel."""
    B, N1, inner = q.shape
    _, N2, two_inner = kv.shape
    assert inner == heads * dim_head and two_inner == 2 * inner
    isz = jnp.dtype(q.dtype).itemsize
    cost = pl.CostEstimate(
        flops=4 * B * heads * N1 * N2 * dim_head,
        transcendentals=B * heads * N1 * N2,
        bytes_accessed=isz * B * (2 * N1 * inner + N2 * two_inner))
    return pl.pallas_call(
        functools.partial(_attention_kernel, heads=heads, dim_head=dim_head, scale=scale),
        out_shape=jax.ShapeDtypeStruct((B, N1, inner), q.dtype),
        grid_spec=pltpu.PrefetchScalarGridSpec(
            num_scalar_prefetch=0,
            grid=(B,),
            in_specs=[
                pl.BlockSpec((1, N1, inner), lambda b: (b, 0, 0)),
                pl.BlockSpec((1, N2, two_inner), lambda b: (b, 0, 0)),
            ],
            out_specs=pl.BlockSpec((1, N1, inner), lambda b: (b, 0, 0)),
        ),
        compiler_params=pltpu.CompilerParams(
            dimension_semantics=("parallel",),
            vmem_limit_bytes=_VMEM_LIMIT),
        cost_estimate=cost,
    )(q, kv)


# --------------------------------- module forward ---------------------------------
def cross_attention_block(x1, x2, p, heads, dim_head):
    """PreNorm2(CrossAttention)(x1, x2) + x1  (residual fused into the to_out kernel)."""
    B, N1, D = x1.shape
    _, N2, _ = x2.shape
    inner = heads * dim_head
    scale = dim_head ** -0.5
    x1f = x1.reshape(B * N1, D)
    x2f = x2.reshape(B * N2, D)

    # PreNorm2's LN then CrossAttention's own LN (the module applies both), fused into the
    # q / kv projections. to_q / to_qkv have bias=False.
    norms = [(p["g_pre2"], p["b_pre2"]), (p["g_attn"], p["b_attn"])]
    q1 = ln_matmul(x1f, norms, p["w_q"])                      # (B*N1, inner)
    kv = ln_matmul(x2f, norms, p["w_kv"])                     # (B*N2, 2*inner); q2 chunk never computed

    # Head split/merge and the k/v split happen inside the attention kernel (pure indexing,
    # no JAX transposes / slice copies); the reshapes below are free row-major reshapes.
    o = attention_pallas(q1.reshape(B, N1, inner), kv.reshape(B, N2, 2 * inner),
                         heads, dim_head, scale)
    o = o.reshape(B * N1, inner)

    # to_out (Linear inner->dim, bias) with the +x1 residual fused into the epilogue.
    # (project_out is True for this config; heads==1 and dim_head==dim would make it Identity.)
    y = matmul_bias_res(o, p["w_out"], p["b_out"], x1f)
    return y.reshape(B, N1, D)


def feed_forward_block(x, p):
    """PreNorm(FeedForward)(x) + x  (LN+Linear1+GELU fused; Linear2+residual fused)."""
    B, N, D = x.shape
    xf = x.reshape(B * N, D)
    h = ln_matmul(xf, [(p["g_ff"], p["b_ff"])], p["w1"], bias=p["b1"], apply_gelu=True)
    y = matmul_bias_res(h, p["w2"], p["b2"], xf)
    return y.reshape(B, N, D)


def cross_transformer(x1, x2, layers, heads, dim_head):
    x = x1
    for p in layers:                     # matches the reference: x1/x2 are re-used each layer
        x = cross_attention_block(x1, x2, p, heads, dim_head)
        x = feed_forward_block(x, p)
    return x


# ------------------------------------ parameters ------------------------------------
def init_layer_params(key, dim, heads, dim_head, mlp_dim, dtype=jnp.float32):
    inner = heads * dim_head
    ks = jax.random.split(key, 14)
    rnd = lambda k, shape, s=1.0: s * jax.random.normal(k, shape, dtype)
    p = {
        "g_pre2": 1.0 + 0.1 * rnd(ks[0], (dim,)),   "b_pre2": 0.1 * rnd(ks[1], (dim,)),
        "g_attn": 1.0 + 0.1 * rnd(ks[2], (dim,)),   "b_attn": 0.1 * rnd(ks[3], (dim,)),
        "w_q":   rnd(ks[4], (inner, dim), dim ** -0.5),
        "w_qkv": rnd(ks[5], (3 * inner, dim), dim ** -0.5),
        "w_out": rnd(ks[6], (dim, inner), inner ** -0.5),    "b_out": 0.05 * rnd(ks[7], (dim,)),
        "g_ff":  1.0 + 0.1 * rnd(ks[8], (dim,)),    "b_ff": 0.1 * rnd(ks[9], (dim,)),
        "w1":    rnd(ks[10], (mlp_dim, dim), dim ** -0.5),   "b1": 0.05 * rnd(ks[11], (mlp_dim,)),
        "w2":    rnd(ks[12], (dim, mlp_dim), mlp_dim ** -0.5), "b2": 0.05 * rnd(ks[13], (dim,)),
    }
    # q2 from to_qkv is never used in CrossAttention.forward; keep only the k/v rows for the kernel path.
    p["w_kv"] = p["w_qkv"][inner:]
    return p


# ------------------------------------ pure-JAX reference ------------------------------------
def ref_cross_transformer(x1, x2, layers, heads, dim_head, eps=_LN_EPS):
    def ln(x, g, b):
        mu = jnp.mean(x, -1, keepdims=True)
        var = jnp.mean((x - mu) ** 2, -1, keepdims=True)
        return (x - mu) / jnp.sqrt(var + eps) * g + b

    inner = heads * dim_head
    scale = dim_head ** -0.5
    B, N1, _ = x1.shape
    N2 = x2.shape[1]

    def attn_block(p):
        a1 = ln(ln(x1, p["g_pre2"], p["b_pre2"]), p["g_attn"], p["b_attn"])
        a2 = ln(ln(x2, p["g_pre2"], p["b_pre2"]), p["g_attn"], p["b_attn"])
        q1 = a1 @ p["w_q"].T
        qkv = a2 @ p["w_qkv"].T
        _, k2, v2 = jnp.split(qkv, 3, axis=-1)
        hs = lambda t, n: t.reshape(B, n, heads, dim_head).transpose(0, 2, 1, 3)
        dots = jnp.einsum("bhqd,bhkd->bhqk", hs(q1, N1), hs(k2, N2)) * scale
        attn = jax.nn.softmax(dots, axis=-1)
        o = jnp.einsum("bhqk,bhkd->bhqd", attn, hs(v2, N2))
        o = o.transpose(0, 2, 1, 3).reshape(B, N1, inner)
        return o @ p["w_out"].T + p["b_out"]

    def ff_block(p, x):
        h = ln(x, p["g_ff"], p["b_ff"]) @ p["w1"].T + p["b1"]
        h = 0.5 * h * (1.0 + jax.scipy.special.erf(h * (2.0 ** -0.5)))   # exact PyTorch GELU
        return h @ p["w2"].T + p["b2"]

    x = x1
    for p in layers:
        x = attn_block(p) + x1
        x = ff_block(p, x) + x
    return x


if __name__ == "__main__":
    B, N1, N2 = 2, 8, 16
    dim, heads, dim_head, mlp_dim, depth = 32, 2, 16, 64, 2

    key = jax.random.PRNGKey(0)
    keys = jax.random.split(key, 2 + depth)
    x1 = jax.random.normal(keys[0], (B, N1, dim), jnp.float32)
    x2 = jax.random.normal(keys[1], (B, N2, dim), jnp.float32)
    layers = [init_layer_params(keys[2 + i], dim, heads, dim_head, mlp_dim) for i in range(depth)]

    fwd = jax.jit(functools.partial(cross_transformer, heads=heads, dim_head=dim_head))
    out = jax.block_until_ready(fwd(x1, x2, layers))

    ref = ref_cross_transformer(x1, x2, layers, heads, dim_head)
    assert out.shape == (B, N1, dim)
    max_err = float(jnp.max(jnp.abs(out - ref)))
    assert jnp.allclose(out, ref, atol=1e-3, rtol=1e-3), f"mismatch vs reference (max abs err {max_err})"
    print("KERNEL_OK")
</pallas_src>

<mosaic_0001>
module attributes {stable_mosaic.version = 11 : i64} {
  func.func @_attention_kernel(%arg0: i32, %arg1: memref<1x8x32xf32, #tpu.memory_space<vmem>>, %arg2: memref<1x16x64xf32, #tpu.memory_space<vmem>>, %arg3: memref<1x8x32xf32, #tpu.memory_space<vmem>>) attributes {dimension_semantics = [#tpu.dimension_semantics<parallel>], iteration_bounds = array<i64: 2>, scalar_prefetch = 0 : i64, scratch_operands = 0 : i64, tpu.core_type = #tpu.core_type<tc>, window_params = [{transform_indices = @transform_0, window_bounds = array<i64: 1, 8, 32>}, {transform_indices = @transform_1, window_bounds = array<i64: 1, 16, 64>}, {transform_indices = @transform_2, window_bounds = array<i64: 1, 8, 32>}]} {
    %c0 = arith.constant 0 : index
    %c0_0 = arith.constant 0 : index
    %c0_1 = arith.constant 0 : index
    %0 = vector.load %arg1[%c0, %c0_0, %c0_1] : memref<1x8x32xf32, #tpu.memory_space<vmem>>, vector<1x8x32xf32>
    %1 = vector.shape_cast %0 : vector<1x8x32xf32> to vector<8x32xf32>
    %c0_2 = arith.constant 0 : index
    %c0_3 = arith.constant 0 : index
    %c0_4 = arith.constant 0 : index
    %2 = vector.load %arg2[%c0_2, %c0_3, %c0_4] : memref<1x16x64xf32, #tpu.memory_space<vmem>>, vector<1x16x64xf32>
    %3 = vector.shape_cast %2 : vector<1x16x64xf32> to vector<16x64xf32>
    %4 = vector.extract_strided_slice %1 {offsets = [0, 0], sizes = [8, 16], strides = [1, 1]} : vector<8x32xf32> to vector<8x16xf32>
    %cst = arith.constant 2.500000e-01 : f32
    %5 = vector.broadcast %cst : f32 to vector<8x16xf32>
    %6 = arith.mulf %4, %5 : vector<8x16xf32>
    %7 = vector.extract_strided_slice %3 {offsets = [0, 0], sizes = [16, 16], strides = [1, 1]} : vector<16x64xf32> to vector<16x16xf32>
    %8 = vector.extract_strided_slice %3 {offsets = [0, 32], sizes = [16, 16], strides = [1, 1]} : vector<16x64xf32> to vector<16x16xf32>
    %cst_5 = arith.constant dense<0.000000e+00> : vector<8x16xf32>
    %9 = tpu.matmul %6, %7, %cst_5 {dimension_numbers = #tpu.dot_dimension_numbers<[1], [1], [0], [0], [0, 0, 1, 0], [], []>} : vector<8x16xf32>, vector<16x16xf32>, vector<8x16xf32> -> vector<8x16xf32>
    %cst_6 = arith.constant dense<0xFF800000> : vector<8xf32>
    %10 = vector.multi_reduction <maximumf>, %9, %cst_6 [1] : vector<8x16xf32> to vector<8xf32>
    %11 = vector.shape_cast %10 : vector<8xf32> to vector<8x1xf32>
    %12 = vector.broadcast %11 : vector<8x1xf32> to vector<8x16xf32>
    %13 = arith.subf %9, %12 : vector<8x16xf32>
    %14 = math.exp %13 : vector<8x16xf32>
    %cst_7 = arith.constant dense<0.000000e+00> : vector<8xf32>
    %15 = vector.multi_reduction <add>, %14, %cst_7 [1] : vector<8x16xf32> to vector<8xf32>
    %16 = vector.shape_cast %15 : vector<8xf32> to vector<8x1xf32>
    %17 = vector.broadcast %16 : vector<8x1xf32> to vector<8x16xf32>
    %18 = arith.divf %14, %17 : vector<8x16xf32>
    %cst_8 = arith.constant dense<0.000000e+00> : vector<8x16xf32>
    %19 = tpu.matmul %18, %8, %cst_8 {dimension_numbers = #tpu.dot_dimension_numbers<[1], [0], [0], [1], [0, 0, 1, 1], [], []>} : vector<8x16xf32>, vector<16x16xf32>, vector<8x16xf32> -> vector<8x16xf32>
    %20 = vector.extract_strided_slice %1 {offsets = [0, 16], sizes = [8, 16], strides = [1, 1]} : vector<8x32xf32> to vector<8x16xf32>
    %cst_9 = arith.constant 2.500000e-01 : f32
    %21 = vector.broadcast %cst_9 : f32 to vector<8x16xf32>
    %22 = arith.mulf %20, %21 : vector<8x16xf32>
    %23 = vector.extract_strided_slice %3 {offsets = [0, 16], sizes = [16, 16], strides = [1, 1]} : vector<16x64xf32> to vector<16x16xf32>
    %24 = vector.extract_strided_slice %3 {offsets = [0, 48], sizes = [16, 16], strides = [1, 1]} : vector<16x64xf32> to vector<16x16xf32>
    %cst_10 = arith.constant dense<0.000000e+00> : vector<8x16xf32>
    %25 = tpu.matmul %22, %23, %cst_10 {dimension_numbers = #tpu.dot_dimension_numbers<[1], [1], [0], [0], [0, 0, 1, 0], [], []>} : vector<8x16xf32>, vector<16x16xf32>, vector<8x16xf32> -> vector<8x16xf32>
    %cst_11 = arith.constant dense<0xFF800000> : vector<8xf32>
    %26 = vector.multi_reduction <maximumf>, %25, %cst_11 [1] : vector<8x16xf32> to vector<8xf32>
    %27 = vector.shape_cast %26 : vector<8xf32> to vector<8x1xf32>
    %28 = vector.broadcast %27 : vector<8x1xf32> to vector<8x16xf32>
    %29 = arith.subf %25, %28 : vector<8x16xf32>
    %30 = math.exp %29 : vector<8x16xf32>
    %cst_12 = arith.constant dense<0.000000e+00> : vector<8xf32>
    %31 = vector.multi_reduction <add>, %30, %cst_12 [1] : vector<8x16xf32> to vector<8xf32>
    %32 = vector.shape_cast %31 : vector<8xf32> to vector<8x1xf32>
    %33 = vector.broadcast %32 : vector<8x1xf32> to vector<8x16xf32>
    %34 = arith.divf %30, %33 : vector<8x16xf32>
    %cst_13 = arith.constant dense<0.000000e+00> : vector<8x16xf32>
    %35 = tpu.matmul %34, %24, %cst_13 {dimension_numbers = #tpu.dot_dimension_numbers<[1], [0], [0], [1], [0, 0, 1, 1], [], []>} : vector<8x16xf32>, vector<16x16xf32>, vector<8x16xf32> -> vector<8x16xf32>
    %36 = tpu.concatenate %19, %35 in 1 : vector<8x16xf32>, vector<8x16xf32> -> vector<8x32xf32>
    %c0_14 = arith.constant 0 : index
    %c0_15 = arith.constant 0 : index
    %c0_16 = arith.constant 0 : index
    %37 = vector.load %arg3[%c0_14, %c0_15, %c0_16] : memref<1x8x32xf32, #tpu.memory_space<vmem>>, vector<1x8x32xf32>
    %38 = vector.shape_cast %37 : vector<1x8x32xf32> to vector<8x32xf32>
    %39 = vector.shape_cast %36 : vector<8x32xf32> to vector<1x8x32xf32>
    tpu.vector_store %arg3[%c0_14, %c0_15, %c0_16], %39 {strides = array<i32>} : memref<1x8x32xf32, #tpu.memory_space<vmem>>, vector<1x8x32xf32>,
    return
  }
  func.func @transform_0(%arg0: i32) -> (i32, i32, i32) {
    %c0_i32 = arith.constant 0 : i32
    %c0_i32_0 = arith.constant 0 : i32
    %c0_i32_1 = arith.constant 0 : i32
    return %arg0, %c0_i32, %c0_i32_0 : i32, i32, i32
  }
  func.func @transform_1(%arg0: i32) -> (i32, i32, i32) {
    %c0_i32 = arith.constant 0 : i32
    %c0_i32_0 = arith.constant 0 : i32
    %c0_i32_1 = arith.constant 0 : i32
    return %arg0, %c0_i32, %c0_i32_0 : i32, i32, i32
  }
  func.func @transform_2(%arg0: i32) -> (i32, i32, i32) {
    %c0_i32 = arith.constant 0 : i32
    %c0_i32_0 = arith.constant 0 : i32
    %c0_i32_1 = arith.constant 0 : i32
    return %arg0, %c0_i32, %c0_i32_0 : i32, i32, i32
  }
}

module attributes {stable_mosaic.version = 11 : i64} {
  func.func @_ln_matmul_kernel(%arg0: i32, %arg1: i32, %arg2: memref<32x32xf32, #tpu.memory_space<vmem>>, %arg3: memref<1x32xf32, #tpu.memory_space<vmem>>, %arg4: memref<1x32xf32, #tpu.memory_space<vmem>>, %arg5: memref<1x32xf32, #tpu.memory_space<vmem>>, %arg6: memref<1x32xf32, #tpu.memory_space<vmem>>, %arg7: memref<64x32xf32, #tpu.memory_space<vmem>>, %arg8: memref<32x64xf32, #tpu.memory_space<vmem>>) attributes {dimension_semantics = [#tpu.dimension_semantics<parallel>, #tpu.dimension_semantics<parallel>], iteration_bounds = array<i64: 1, 1>, scalar_prefetch = 0 : i64, scratch_operands = 0 : i64, tpu.core_type = #tpu.core_type<tc>, window_params = [{transform_indices = @transform_0, window_bounds = array<i64: 32, 32>}, {pipeline_mode = #tpu.pipeline_mode<synchronous>, transform_indices = @transform_1, window_bounds = array<i64: 1, 32>}, {pipeline_mode = #tpu.pipeline_mode<synchronous>, transform_indices = @transform_2, window_bounds = array<i64: 1, 32>}, {pipeline_mode = #tpu.pipeline_mode<synchronous>, transform_indices = @transform_3, window_bounds = array<i64: 1, 32>}, {pipeline_mode = #tpu.pipeline_mode<synchronous>, transform_indices = @transform_4, window_bounds = array<i64: 1, 32>}, {transform_indices = @transform_5, window_bounds = array<i64: 64, 32>}, {transform_indices = @transform_6, window_bounds = array<i64: 32, 64>}]} {
    %c0 = arith.constant 0 : index
    %c0_0 = arith.constant 0 : index
    %0 = vector.load %arg2[%c0, %c0_0] : memref<32x32xf32, #tpu.memory_space<vmem>>, vector<32x32xf32>
    %c0_1 = arith.constant 0 : index
    %c0_2 = arith.constant 0 : index
    %1 = vector.load %arg3[%c0_1, %c0_2] : memref<1x32xf32, #tpu.memory_space<vmem>>, vector<1x32xf32>
    %c0_3 = arith.constant 0 : index
    %c0_4 = arith.constant 0 : index
    %2 = vector.load %arg4[%c0_3, %c0_4] : memref<1x32xf32, #tpu.memory_space<vmem>>, vector<1x32xf32>
    %cst = arith.constant dense<0.000000e+00> : vector<32xf32>
    %3 = vector.multi_reduction <add>, %0, %cst [1] : vector<32x32xf32> to vector<32xf32>
    %4 = vector.shape_cast %3 : vector<32xf32> to vector<32x1xf32>
    %cst_5 = arith.constant 3.200000e+01 : f32
    %5 = vector.broadcast %cst_5 : f32 to vector<32x1xf32>
    %6 = arith.divf %4, %5 : vector<32x1xf32>
    %7 = vector.broadcast %6 : vector<32x1xf32> to vector<32x32xf32>
    %8 = arith.subf %0, %7 : vector<32x32xf32>
    %9 = arith.mulf %8, %8 : vector<32x32xf32>
    %cst_6 = arith.constant dense<0.000000e+00> : vector<32xf32>
    %10 = vector.multi_reduction <add>, %9, %cst_6 [1] : vector<32x32xf32> to vector<32xf32>
    %11 = vector.shape_cast %10 : vector<32xf32> to vector<32x1xf32>
    %cst_7 = arith.constant 3.200000e+01 : f32
    %12 = vector.broadcast %cst_7 : f32 to vector<32x1xf32>
    %13 = arith.divf %11, %12 : vector<32x1xf32>
    %cst_8 = arith.constant 9.99999974E-6 : f32
    %14 = vector.broadcast %cst_8 : f32 to vector<32x1xf32>
    %15 = arith.addf %13, %14 : vector<32x1xf32>
    %16 = math.rsqrt %15 : vector<32x1xf32>
    %17 = vector.broadcast %16 : vector<32x1xf32> to vector<32x32xf32>
    %18 = arith.mulf %8, %17 : vector<32x32xf32>
    %19 = vector.broadcast %1 : vector<1x32xf32> to vector<32x32xf32>
    %20 = arith.mulf %18, %19 : vector<32x32xf32>
    %21 = vector.broadcast %2 : vector<1x32xf32> to vector<32x32xf32>
    %22 = arith.addf %20, %21 : vector<32x32xf32>
    %c0_9 = arith.constant 0 : index
    %c0_10 = arith.constant 0 : index
    %23 = vector.load %arg5[%c0_9, %c0_10] : memref<1x32xf32, #tpu.memory_space<vmem>>, vector<1x32xf32>
    %c0_11 = arith.constant 0 : index
    %c0_12 = arith.constant 0 : index
    %24 = vector.load %arg6[%c0_11, %c0_12] : memref<1x32xf32, #tpu.memory_space<vmem>>, vector<1x32xf32>
    %cst_13 = arith.constant dense<0.000000e+00> : vector<32xf32>
    %25 = vector.multi_reduction <add>, %22, %cst_13 [1] : vector<32x32xf32> to vector<32xf32>
    %26 = vector.shape_cast %25 : vector<32xf32> to vector<32x1xf32>
    %cst_14 = arith.constant 3.200000e+01 : f32
    %27 = vector.broadcast %cst_14 : f32 to vector<32x1xf32>
    %28 = arith.divf %26, %27 : vector<32x1xf32>
    %29 = vector.broadcast %28 : vector<32x1xf32> to vector<32x32xf32>
    %30 = arith.subf %22, %29 : vector<32x32xf32>
    %31 = arith.mulf %30, %30 : vector<32x32xf32>
    %cst_15 = arith.constant dense<0.000000e+00> : vector<32xf32>
    %32 = vector.multi_reduction <add>, %31, %cst_15 [1] : vector<32x32xf32> to vector<32xf32>
    %33 = vector.shape_cast %32 : vector<32xf32> to vector<32x1xf32>
    %cst_16 = arith.constant 3.200000e+01 : f32
    %34 = vector.broadcast %cst_16 : f32 to vector<32x1xf32>
    %35 = arith.divf %33, %34 : vector<32x1xf32>
    %cst_17 = arith.constant 9.99999974E-6 : f32
    %36 = vector.broadcast %cst_17 : f32 to vector<32x1xf32>
    %37 = arith.addf %35, %36 : vector<32x1xf32>
    %38 = math.rsqrt %37 : vector<32x1xf32>
    %39 = vector.broadcast %38 : vector<32x1xf32> to vector<32x32xf32>
    %40 = arith.mulf %30, %39 : vector<32x32xf32>
    %41 = vector.broadcast %23 : vector<1x32xf32> to vector<32x32xf32>
    %42 = arith.mulf %40, %41 : vector<32x32xf32>
    %43 = vector.broadcast %24 : vector<1x32xf32> to vector<32x32xf32>
    %44 = arith.addf %42, %43 : vector<32x32xf32>
    %c0_18 = arith.constant 0 : index
    %c0_19 = arith.constant 0 : index
    %45 = vector.load %arg7[%c0_18, %c0_19] : memref<64x32xf32, #tpu.memory_space<vmem>>, vector<64x32xf32>
    %cst_20 = arith.constant dense<0.000000e+00> : vector<32x64xf32>
    %46 = tpu.matmul %44, %45, %cst_20 {dimension_numbers = #tpu.dot_dimension_numbers<[1], [1], [0], [0], [0, 0, 1, 0], [], []>} : vector<32x32xf32>, vector<64x32xf32>, vector<32x64xf32> -> vector<32x64xf32>
    %c0_21 = arith.constant 0 : index
    %c0_22 = arith.constant 0 : index
    %47 = vector.load %arg8[%c0_21, %c0_22] : memref<32x64xf32, #tpu.memory_space<vmem>>, vector<32x64xf32>
    tpu.vector_store %arg8[%c0_21, %c0_22], %46 {strides = array<i32>} : memref<32x64xf32, #tpu.memory_space<vmem>>, vector<32x64xf32>,
    return
  }
  func.func @transform_0(%arg0: i32, %arg1: i32) -> (i32, i32) {
    %c0_i32 = arith.constant 0 : i32
    %c0_i32_0 = arith.constant 0 : i32
    return %arg0, %c0_i32 : i32, i32
  }
  func.func @transform_1(%arg0: i32, %arg1: i32) -> (i32, i32) {
    %c0_i32 = arith.constant 0 : i32
    %c0_i32_0 = arith.constant 0 : i32
    %c0_i32_1 = arith.constant 0 : i32
    return %c0_i32, %c0_i32_0 : i32, i32
  }
  func.func @transform_2(%arg0: i32, %arg1: i32) -> (i32, i32) {
    %c0_i32 = arith.constant 0 : i32
    %c0_i32_0 = arith.constant 0 : i32
    %c0_i32_1 = arith.constant 0 : i32
    return %c0_i32, %c0_i32_0 : i32, i32
  }
  func.func @transform_3(%arg0: i32, %arg1: i32) -> (i32, i32) {
    %c0_i32 = arith.constant 0 : i32
    %c0_i32_0 = arith.constant 0 : i32
    %c0_i32_1 = arith.constant 0 : i32
    return %c0_i32, %c0_i32_0 : i32, i32
  }
  func.func @transform_4(%arg0: i32, %arg1: i32) -> (i32, i32) {
    %c0_i32 = arith.constant 0 : i32
    %c0_i32_0 = arith.constant 0 : i32
    %c0_i32_1 = arith.constant 0 : i32
    return %c0_i32, %c0_i32_0 : i32, i32
  }
  func.func @transform_5(%arg0: i32, %arg1: i32) -> (i32, i32) {
    %c0_i32 = arith.constant 0 : i32
    %c0_i32_0 = arith.constant 0 : i32
    return %arg1, %c0_i32 : i32, i32
  }
  func.func @transform_6(%arg0: i32, %arg1: i32) -> (i32, i32) {
    %c0_i32 = arith.constant 0 : i32
    return %arg0, %arg1 : i32, i32
  }
}

module attributes {stable_mosaic.version = 11 : i64} {
  func.func @_ln_matmul_kernel(%arg0: i32, %arg1: i32, %arg2: memref<16x32xf32, #tpu.memory_space<vmem>>, %arg3: memref<1x32xf32, #tpu.memory_space<vmem>>, %arg4: memref<1x32xf32, #tpu.memory_space<vmem>>, %arg5: memref<1x32xf32, #tpu.memory_space<vmem>>, %arg6: memref<1x32xf32, #tpu.memory_space<vmem>>, %arg7: memref<32x32xf32, #tpu.memory_space<vmem>>, %arg8: memref<16x32xf32, #tpu.memory_space<vmem>>) attributes {dimension_semantics = [#tpu.dimension_semantics<parallel>, #tpu.dimension_semantics<parallel>], iteration_bounds = array<i64: 1, 1>, scalar_prefetch = 0 : i64, scratch_operands = 0 : i64, tpu.core_type = #tpu.core_type<tc>, window_params = [{transform_indices = @transform_0, window_bounds = array<i64: 16, 32>}, {pipeline_mode = #tpu.pipeline_mode<synchronous>, transform_indices = @transform_1, window_bounds = array<i64: 1, 32>}, {pipeline_mode = #tpu.pipeline_mode<synchronous>, transform_indices = @transform_2, window_bounds = array<i64: 1, 32>}, {pipeline_mode = #tpu.pipeline_mode<synchronous>, transform_indices = @transform_3, window_bounds = array<i64: 1, 32>}, {pipeline_mode = #tpu.pipeline_mode<synchronous>, transform_indices = @transform_4, window_bounds = array<i64: 1, 32>}, {transform_indices = @transform_5, window_bounds = array<i64: 32, 32>}, {transform_indices = @transform_6, window_bounds = array<i64: 16, 32>}]} {
    %c0 = arith.constant 0 : index
    %c0_0 = arith.constant 0 : index
    %0 = vector.load %arg2[%c0, %c0_0] : memref<16x32xf32, #tpu.memory_space<vmem>>, vector<16x32xf32>
    %c0_1 = arith.constant 0 : index
    %c0_2 = arith.constant 0 : index
    %1 = vector.load %arg3[%c0_1, %c0_2] : memref<1x32xf32, #tpu.memory_space<vmem>>, vector<1x32xf32>
    %c0_3 = arith.constant 0 : index
    %c0_4 = arith.constant 0 : index
    %2 = vector.load %arg4[%c0_3, %c0_4] : memref<1x32xf32, #tpu.memory_space<vmem>>, vector<1x32xf32>
    %cst = arith.constant dense<0.000000e+00> : vector<16xf32>
    %3 = vector.multi_reduction <add>, %0, %cst [1] : vector<16x32xf32> to vector<16xf32>
    %4 = vector.shape_cast %3 : vector<16xf32> to vector<16x1xf32>
    %cst_5 = arith.constant 3.200000e+01 : f32
    %5 = vector.broadcast %cst_5 : f32 to vector<16x1xf32>
    %6 = arith.divf %4, %5 : vector<16x1xf32>
    %7 = vector.broadcast %6 : vector<16x1xf32> to vector<16x32xf32>
    %8 = arith.subf %0, %7 : vector<16x32xf32>
    %9 = arith.mulf %8, %8 : vector<16x32xf32>
    %cst_6 = arith.constant dense<0.000000e+00> : vector<16xf32>
    %10 = vector.multi_reduction <add>, %9, %cst_6 [1] : vector<16x32xf32> to vector<16xf32>
    %11 = vector.shape_cast %10 : vector<16xf32> to vector<16x1xf32>
    %cst_7 = arith.constant 3.200000e+01 : f32
    %12 = vector.broadcast %cst_7 : f32 to vector<16x1xf32>
    %13 = arith.divf %11, %12 : vector<16x1xf32>
    %cst_8 = arith.constant 9.99999974E-6 : f32
    %14 = vector.broadcast %cst_8 : f32 to vector<16x1xf32>
    %15 = arith.addf %13, %14 : vector<16x1xf32>
    %16 = math.rsqrt %15 : vector<16x1xf32>
    %17 = vector.broadcast %16 : vector<16x1xf32> to vector<16x32xf32>
    %18 = arith.mulf %8, %17 : vector<16x32xf32>
    %19 = vector.broadcast %1 : vector<1x32xf32> to vector<16x32xf32>
    %20 = arith.mulf %18, %19 : vector<16x32xf32>
    %21 = vector.broadcast %2 : vector<1x32xf32> to vector<16x32xf32>
    %22 = arith.addf %20, %21 : vector<16x32xf32>
    %c0_9 = arith.constant 0 : index
    %c0_10 = arith.constant 0 : index
    %23 = vector.load %arg5[%c0_9, %c0_10] : memref<1x32xf32, #tpu.memory_space<vmem>>, vector<1x32xf32>
    %c0_11 = arith.constant 0 : index
    %c0_12 = arith.constant 0 : index
    %24 = vector.load %arg6[%c0_11, %c0_12] : memref<1x32xf32, #tpu.memory_space<vmem>>, vector<1x32xf32>
    %cst_13 = arith.constant dense<0.000000e+00> : vector<16xf32>
    %25 = vector.multi_reduction <add>, %22, %cst_13 [1] : vector<16x32xf32> to vector<16xf32>
    %26 = vector.shape_cast %25 : vector<16xf32> to vector<16x1xf32>
    %cst_14 = arith.constant 3.200000e+01 : f32
    %27 = vector.broadcast %cst_14 : f32 to vector<16x1xf32>
    %28 = arith.divf %26, %27 : vector<16x1xf32>
    %29 = vector.broadcast %28 : vector<16x1xf32> to vector<16x32xf32>
    %30 = arith.subf %22, %29 : vector<16x32xf32>
    %31 = arith.mulf %30, %30 : vector<16x32xf32>
    %cst_15 = arith.constant dense<0.000000e+00> : vector<16xf32>
    %32 = vector.multi_reduction <add>, %31, %cst_15 [1] : vector<16x32xf32> to vector<16xf32>
    %33 = vector.shape_cast %32 : vector<16xf32> to vector<16x1xf32>
    %cst_16 = arith.constant 3.200000e+01 : f32
    %34 = vector.broadcast %cst_16 : f32 to vector<16x1xf32>
    %35 = arith.divf %33, %34 : vector<16x1xf32>
    %cst_17 = arith.constant 9.99999974E-6 : f32
    %36 = vector.broadcast %cst_17 : f32 to vector<16x1xf32>
    %37 = arith.addf %35, %36 : vector<16x1xf32>
    %38 = math.rsqrt %37 : vector<16x1xf32>
    %39 = vector.broadcast %38 : vector<16x1xf32> to vector<16x32xf32>
    %40 = arith.mulf %30, %39 : vector<16x32xf32>
    %41 = vector.broadcast %23 : vector<1x32xf32> to vector<16x32xf32>
    %42 = arith.mulf %40, %41 : vector<16x32xf32>
    %43 = vector.broadcast %24 : vector<1x32xf32> to vector<16x32xf32>
    %44 = arith.addf %42, %43 : vector<16x32xf32>
    %c0_18 = arith.constant 0 : index
    %c0_19 = arith.constant 0 : index
    %45 = vector.load %arg7[%c0_18, %c0_19] : memref<32x32xf32, #tpu.memory_space<vmem>>, vector<32x32xf32>
    %cst_20 = arith.constant dense<0.000000e+00> : vector<16x32xf32>
    %46 = tpu.matmul %44, %45, %cst_20 {dimension_numbers = #tpu.dot_dimension_numbers<[1], [1], [0], [0], [0, 0, 1, 0], [], []>} : vector<16x32xf32>, vector<32x32xf32>, vector<16x32xf32> -> vector<16x32xf32>
    %c0_21 = arith.constant 0 : index
    %c0_22 = arith.constant 0 : index
    %47 = vector.load %arg8[%c0_21, %c0_22] : memref<16x32xf32, #tpu.memory_space<vmem>>, vector<16x32xf32>
    tpu.vector_store %arg8[%c0_21, %c0_22], %46 {strides = array<i32>} : memref<16x32xf32, #tpu.memory_space<vmem>>, vector<16x32xf32>,
    return
  }
  func.func @transform_0(%arg0: i32, %arg1: i32) -> (i32, i32) {
    %c0_i32 = arith.constant 0 : i32
    %c0_i32_0 = arith.constant 0 : i32
    return %arg0, %c0_i32 : i32, i32
  }
  func.func @transform_1(%arg0: i32, %arg1: i32) -> (i32, i32) {
    %c0_i32 = arith.constant 0 : i32
    %c0_i32_0 = arith.constant 0 : i32
    %c0_i32_1 = arith.constant 0 : i32
    return %c0_i32, %c0_i32_0 : i32, i32
  }
  func.func @transform_2(%arg0: i32, %arg1: i32) -> (i32, i32) {
    %c0_i32 = arith.constant 0 : i32
    %c0_i32_0 = arith.constant 0 : i32
    %c0_i32_1 = arith.constant 0 : i32
    return %c0_i32, %c0_i32_0 : i32, i32
  }
  func.func @transform_3(%arg0: i32, %arg1: i32) -> (i32, i32) {
    %c0_i32 = arith.constant 0 : i32
    %c0_i32_0 = arith.constant 0 : i32
    %c0_i32_1 = arith.constant 0 : i32
    return %c0_i32, %c0_i32_0 : i32, i32
  }
  func.func @transform_4(%arg0: i32, %arg1: i32) -> (i32, i32) {
    %c0_i32 = arith.constant 0 : i32
    %c0_i32_0 = arith.constant 0 : i32
    %c0_i32_1 = arith.constant 0 : i32
    return %c0_i32, %c0_i32_0 : i32, i32
  }
  func.func @transform_5(%arg0: i32, %arg1: i32) -> (i32, i32) {
    %c0_i32 = arith.constant 0 : i32
    %c0_i32_0 = arith.constant 0 : i32
    return %arg1, %c0_i32 : i32, i32
  }
  func.func @transform_6(%arg0: i32, %arg1: i32) -> (i32, i32) {
    %c0_i32 = arith.constant 0 : i32
    return %arg0, %arg1 : i32, i32
  }
}

module attributes {stable_mosaic.version = 11 : i64} {
  func.func @_matmul_bias_res_kernel(%arg0: i32, %arg1: i32, %arg2: i32, %arg3: memref<16x32xf32, #tpu.memory_space<vmem>>, %arg4: memref<32x32xf32, #tpu.memory_space<vmem>>, %arg5: memref<1x32xf32, #tpu.memory_space<vmem>>, %arg6: memref<16x32xf32, #tpu.memory_space<vmem>>, %arg7: memref<16x32xf32, #tpu.memory_space<vmem>>, %arg8: memref<16x32xf32, #tpu.memory_space<vmem>>) attributes {dimension_semantics = [#tpu.dimension_semantics<parallel>, #tpu.dimension_semantics<parallel>, #tpu.dimension_semantics<arbitrary>], iteration_bounds = array<i64: 1, 1, 1>, scalar_prefetch = 0 : i64, scratch_operands = 1 : i64, tpu.core_type = #tpu.core_type<tc>, window_params = [{transform_indices = @transform_0, window_bounds = array<i64: 16, 32>}, {transform_indices = @transform_1, window_bounds = array<i64: 32, 32>}, {transform_indices = @transform_2, window_bounds = array<i64: 1, 32>}, {transform_indices = @transform_3, window_bounds = array<i64: 16, 32>}, {transform_indices = @transform_4, window_bounds = array<i64: 16, 32>}]} {
    %c0_i32 = arith.constant 0 : i32
    %0 = arith.cmpi eq, %arg2, %c0_i32 : i32
    %1 = arith.extui %0 : i1 to i32
    %c0_i32_0 = arith.constant 0 : i32
    %2 = arith.cmpi ne, %1, %c0_i32_0 : i32
    scf.if %2 {
      %cst_10 = arith.constant 0.000000e+00 : f32
      %12 = vector.broadcast %cst_10 : f32 to vector<16x32xf32>
      %c0_11 = arith.constant 0 : index
      %c0_12 = arith.constant 0 : index
      %13 = vector.load %arg8[%c0_11, %c0_12] : memref<16x32xf32, #tpu.memory_space<vmem>>, vector<16x32xf32>
      tpu.vector_store %arg8[%c0_11, %c0_12], %12 {strides = array<i32>} : memref<16x32xf32, #tpu.memory_space<vmem>>, vector<16x32xf32>,
    } else {
    }
    %c0 = arith.constant 0 : index
    %c0_1 = arith.constant 0 : index
    %3 = vector.load %arg8[%c0, %c0_1] : memref<16x32xf32, #tpu.memory_space<vmem>>, vector<16x32xf32>
    %c0_2 = arith.constant 0 : index
    %c0_3 = arith.constant 0 : index
    %4 = vector.load %arg3[%c0_2, %c0_3] : memref<16x32xf32, #tpu.memory_space<vmem>>, vector<16x32xf32>
    %c0_4 = arith.constant 0 : index
    %c0_5 = arith.constant 0 : index
    %5 = vector.load %arg4[%c0_4, %c0_5] : memref<32x32xf32, #tpu.memory_space<vmem>>, vector<32x32xf32>
    %cst = arith.constant dense<0.000000e+00> : vector<16x32xf32>
    %6 = tpu.matmul %4, %5, %cst {dimension_numbers = #tpu.dot_dimension_numbers<[1], [1], [0], [0], [0, 0, 1, 0], [], []>} : vector<16x32xf32>, vector<32x32xf32>, vector<16x32xf32> -> vector<16x32xf32>
    %7 = arith.addf %3, %6 : vector<16x32xf32>
    %c0_6 = arith.constant 0 : index
    %c0_7 = arith.constant 0 : index
    %8 = vector.load %arg8[%c0_6, %c0_7] : memref<16x32xf32, #tpu.memory_space<vmem>>, vector<16x32xf32>
    tpu.vector_store %arg8[%c0_6, %c0_7], %7 {strides = array<i32>} : memref<16x32xf32, #tpu.memory_space<vmem>>, vector<16x32xf32>,
    %c0_i32_8 = arith.constant 0 : i32
    %9 = arith.cmpi eq, %arg2, %c0_i32_8 : i32
    %10 = arith.extui %9 : i1 to i32
    %c0_i32_9 = arith.constant 0 : i32
    %11 = arith.cmpi ne, %10, %c0_i32_9 : i32
    scf.if %11 {
      %c0_10 = arith.constant 0 : index
      %c0_11 = arith.constant 0 : index
      %12 = vector.load %arg8[%c0_10, %c0_11] : memref<16x32xf32, #tpu.memory_space<vmem>>, vector<16x32xf32>
      %c0_12 = arith.constant 0 : index
      %c0_13 = arith.constant 0 : index
      %13 = vector.load %arg5[%c0_12, %c0_13] : memref<1x32xf32, #tpu.memory_space<vmem>>, vector<1x32xf32>
      %14 = vector.broadcast %13 : vector<1x32xf32> to vector<16x32xf32>
      %15 = arith.addf %12, %14 : vector<16x32xf32>
      %c0_14 = arith.constant 0 : index
      %c0_15 = arith.constant 0 : index
      %16 = vector.load %arg6[%c0_14, %c0_15] : memref<16x32xf32, #tpu.memory_space<vmem>>, vector<16x32xf32>
      %17 = arith.addf %15, %16 : vector<16x32xf32>
      %c0_16 = arith.constant 0 : index
      %c0_17 = arith.constant 0 : index
      %18 = vector.load %arg7[%c0_16, %c0_17] : memref<16x32xf32, #tpu.memory_space<vmem>>, vector<16x32xf32>
      tpu.vector_store %arg7[%c0_16, %c0_17], %17 {strides = array<i32>} : memref<16x32xf32, #tpu.memory_space<vmem>>, vector<16x32xf32>,
    } else {
    }
    return
  }
  func.func @transform_0(%arg0: i32, %arg1: i32, %arg2: i32) -> (i32, i32) {
    %c0_i32 = arith.constant 0 : i32
    return %arg0, %arg2 : i32, i32
  }
  func.func @transform_1(%arg0: i32, %arg1: i32, %arg2: i32) -> (i32, i32) {
    %c0_i32 = arith.constant 0 : i32
    return %arg1, %arg2 : i32, i32
  }
  func.func @transform_2(%arg0: i32, %arg1: i32, %arg2: i32) -> (i32, i32) {
    %c0_i32 = arith.constant 0 : i32
    %c0_i32_0 = arith.constant 0 : i32
    return %c0_i32, %arg1 : i32, i32
  }
  func.func @transform_3(%arg0: i32, %arg1: i32, %arg2: i32) -> (i32, i32) {
    %c0_i32 = arith.constant 0 : i32
    return %arg0, %arg1 : i32, i32
  }
  func.func @transform_4(%arg0: i32, %arg1: i32, %arg2: i32) -> (i32, i32) {
    %c0_i32 = arith.constant 0 : i32
    return %arg0, %arg1 : i32, i32
  }
}

module attributes {stable_mosaic.version = 11 : i64} {
  func.func @_ln_matmul_kernel(%arg0: i32, %arg1: i32, %arg2: memref<16x32xf32, #tpu.memory_space<vmem>>, %arg3: memref<1x32xf32, #tpu.memory_space<vmem>>, %arg4: memref<1x32xf32, #tpu.memory_space<vmem>>, %arg5: memref<64x32xf32, #tpu.memory_space<vmem>>, %arg6: memref<1x64xf32, #tpu.memory_space<vmem>>, %arg7: memref<16x64xf32, #tpu.memory_space<vmem>>) attributes {dimension_semantics = [#tpu.dimension_semantics<parallel>, #tpu.dimension_semantics<parallel>], iteration_bounds = array<i64: 1, 1>, scalar_prefetch = 0 : i64, scratch_operands = 0 : i64, tpu.core_type = #tpu.core_type<tc>, window_params = [{transform_indices = @transform_0, window_bounds = array<i64: 16, 32>}, {pipeline_mode = #tpu.pipeline_mode<synchronous>, transform_indices = @transform_1, window_bounds = array<i64: 1, 32>}, {pipeline_mode = #tpu.pipeline_mode<synchronous>, transform_indices = @transform_2, window_bounds = array<i64: 1, 32>}, {transform_indices = @transform_3, window_bounds = array<i64: 64, 32>}, {transform_indices = @transform_4, window_bounds = array<i64: 1, 64>}, {transform_indices = @transform_5, window_bounds = array<i64: 16, 64>}]} {
    %c0 = arith.constant 0 : index
    %c0_0 = arith.constant 0 : index
    %0 = vector.load %arg2[%c0, %c0_0] : memref<16x32xf32, #tpu.memory_space<vmem>>, vector<16x32xf32>
    %c0_1 = arith.constant 0 : index
    %c0_2 = arith.constant 0 : index
    %1 = vector.load %arg3[%c0_1, %c0_2] : memref<1x32xf32, #tpu.memory_space<vmem>>, vector<1x32xf32>
    %c0_3 = arith.constant 0 : index
    %c0_4 = arith.constant 0 : index
    %2 = vector.load %arg4[%c0_3, %c0_4] : memref<1x32xf32, #tpu.memory_space<vmem>>, vector<1x32xf32>
    %cst = arith.constant dense<0.000000e+00> : vector<16xf32>
    %3 = vector.multi_reduction <add>, %0, %cst [1] : vector<16x32xf32> to vector<16xf32>
    %4 = vector.shape_cast %3 : vector<16xf32> to vector<16x1xf32>
    %cst_5 = arith.constant 3.200000e+01 : f32
    %5 = vector.broadcast %cst_5 : f32 to vector<16x1xf32>
    %6 = arith.divf %4, %5 : vector<16x1xf32>
    %7 = vector.broadcast %6 : vector<16x1xf32> to vector<16x32xf32>
    %8 = arith.subf %0, %7 : vector<16x32xf32>
    %9 = arith.mulf %8, %8 : vector<16x32xf32>
    %cst_6 = arith.constant dense<0.000000e+00> : vector<16xf32>
    %10 = vector.multi_reduction <add>, %9, %cst_6 [1] : vector<16x32xf32> to vector<16xf32>
    %11 = vector.shape_cast %10 : vector<16xf32> to vector<16x1xf32>
    %cst_7 = arith.constant 3.200000e+01 : f32
    %12 = vector.broadcast %cst_7 : f32 to vector<16x1xf32>
    %13 = arith.divf %11, %12 : vector<16x1xf32>
    %cst_8 = arith.constant 9.99999974E-6 : f32
    %14 = vector.broadcast %cst_8 : f32 to vector<16x1xf32>
    %15 = arith.addf %13, %14 : vector<16x1xf32>
    %16 = math.rsqrt %15 : vector<16x1xf32>
    %17 = vector.broadcast %16 : vector<16x1xf32> to vector<16x32xf32>
    %18 = arith.mulf %8, %17 : vector<16x32xf32>
    %19 = vector.broadcast %1 : vector<1x32xf32> to vector<16x32xf32>
    %20 = arith.mulf %18, %19 : vector<16x32xf32>
    %21 = vector.broadcast %2 : vector<1x32xf32> to vector<16x32xf32>
    %22 = arith.addf %20, %21 : vector<16x32xf32>
    %c0_9 = arith.constant 0 : index
    %c0_10 = arith.constant 0 : index
    %23 = vector.load %arg5[%c0_9, %c0_10] : memref<64x32xf32, #tpu.memory_space<vmem>>, vector<64x32xf32>
    %cst_11 = arith.constant dense<0.000000e+00> : vector<16x64xf32>
    %24 = tpu.matmul %22, %23, %cst_11 {dimension_numbers = #tpu.dot_dimension_numbers<[1], [1], [0], [0], [0, 0, 1, 0], [], []>} : vector<16x32xf32>, vector<64x32xf32>, vector<16x64xf32> -> vector<16x64xf32>
    %c0_12 = arith.constant 0 : index
    %c0_13 = arith.constant 0 : index
    %25 = vector.load %arg6[%c0_12, %c0_13] : memref<1x64xf32, #tpu.memory_space<vmem>>, vector<1x64xf32>
    %26 = vector.broadcast %25 : vector<1x64xf32> to vector<16x64xf32>
    %27 = arith.addf %24, %26 : vector<16x64xf32>
    %cst_14 = arith.constant 5.000000e-01 : f32
    %28 = vector.broadcast %cst_14 : f32 to vector<16x64xf32>
    %29 = arith.mulf %28, %27 : vector<16x64xf32>
    %cst_15 = arith.constant 0.707106769 : f32
    %30 = vector.broadcast %cst_15 : f32 to vector<16x64xf32>
    %31 = arith.mulf %27, %30 : vector<16x64xf32>
    %32 = math.absf %31 : vector<16x64xf32>
    %cst_16 = arith.constant 0.327591091 : f32
    %33 = vector.broadcast %cst_16 : f32 to vector<16x64xf32>
    %34 = arith.mulf %33, %32 : vector<16x64xf32>
    %cst_17 = arith.constant 1.000000e+00 : f32
    %35 = vector.broadcast %cst_17 : f32 to vector<16x64xf32>
    %36 = arith.addf %35, %34 : vector<16x64xf32>
    %cst_18 = arith.constant 1.000000e+00 : f32
    %37 = vector.broadcast %cst_18 : f32 to vector<16x64xf32>
    %38 = arith.divf %37, %36 : vector<16x64xf32>
    %cst_19 = arith.constant 1.06140542 : f32
    %39 = vector.broadcast %cst_19 : f32 to vector<16x64xf32>
    %40 = arith.mulf %38, %39 : vector<16x64xf32>
    %cst_20 = arith.constant -1.45315206 : f32
    %41 = vector.broadcast %cst_20 : f32 to vector<16x64xf32>
    %42 = arith.addf %41, %40 : vector<16x64xf32>
    %43 = arith.mulf %38, %42 : vector<16x64xf32>
    %cst_21 = arith.constant 1.42141378 : f32
    %44 = vector.broadcast %cst_21 : f32 to vector<16x64xf32>
    %45 = arith.addf %44, %43 : vector<16x64xf32>
    %46 = arith.mulf %38, %45 : vector<16x64xf32>
    %cst_22 = arith.constant -0.284496725 : f32
    %47 = vector.broadcast %cst_22 : f32 to vector<16x64xf32>
    %48 = arith.addf %47, %46 : vector<16x64xf32>
    %49 = arith.mulf %38, %48 : vector<16x64xf32>
    %cst_23 = arith.constant 0.254829586 : f32
    %50 = vector.broadcast %cst_23 : f32 to vector<16x64xf32>
    %51 = arith.addf %50, %49 : vector<16x64xf32>
    %52 = arith.mulf %38, %51 : vector<16x64xf32>
    %cst_24 = arith.constant 0.000000e+00 : f32
    %53 = vector.broadcast %cst_24 : f32 to vector<16x64xf32>
    %54 = arith.subf %53, %32 : vector<16x64xf32>
    %55 = arith.mulf %54, %32 : vector<16x64xf32>
    %56 = math.exp %55 : vector<16x64xf32>
    %57 = arith.mulf %52, %56 : vector<16x64xf32>
    %cst_25 = arith.constant 1.000000e+00 : f32
    %58 = vector.broadcast %cst_25 : f32 to vector<16x64xf32>
    %59 = arith.subf %58, %57 : vector<16x64xf32>
    %cst_26 = arith.constant 0.000000e+00 : f32
    %60 = vector.broadcast %cst_26 : f32 to vector<16x64xf32>
    %61 = arith.cmpf olt, %31, %60 : vector<16x64xf32>
    %cst_27 = arith.constant 0.000000e+00 : f32
    %62 = vector.broadcast %cst_27 : f32 to vector<16x64xf32>
    %63 = arith.subf %62, %59 : vector<16x64xf32>
    %64 = arith.select %61, %63, %59 : vector<16x64xi1>, vector<16x64xf32>
    %cst_28 = arith.constant 1.000000e+00 : f32
    %65 = vector.broadcast %cst_28 : f32 to vector<16x64xf32>
    %66 = arith.addf %65, %64 : vector<16x64xf32>
    %67 = arith.mulf %29, %66 : vector<16x64xf32>
    %c0_29 = arith.constant 0 : index
    %c0_30 = arith.constant 0 : index
    %68 = vector.load %arg7[%c0_29, %c0_30] : memref<16x64xf32, #tpu.memory_space<vmem>>, vector<16x64xf32>
    tpu.vector_store %arg7[%c0_29, %c0_30], %67 {strides = array<i32>} : memref<16x64xf32, #tpu.memory_space<vmem>>, vector<16x64xf32>,
    return
  }
  func.func @transform_0(%arg0: i32, %arg1: i32) -> (i32, i32) {
    %c0_i32 = arith.constant 0 : i32
    %c0_i32_0 = arith.constant 0 : i32
    return %arg0, %c0_i32 : i32, i32
  }
  func.func @transform_1(%arg0: i32, %arg1: i32) -> (i32, i32) {
    %c0_i32 = arith.constant 0 : i32
    %c0_i32_0 = arith.constant 0 : i32
    %c0_i32_1 = arith.constant 0 : i32
    return %c0_i32, %c0_i32_0 : i32, i32
  }
  func.func @transform_2(%arg0: i32, %arg1: i32) -> (i32, i32) {
    %c0_i32 = arith.constant 0 : i32
    %c0_i32_0 = arith.constant 0 : i32
    %c0_i32_1 = arith.constant 0 : i32
    return %c0_i32, %c0_i32_0 : i32, i32
  }
  func.func @transform_3(%arg0: i32, %arg1: i32) -> (i32, i32) {
    %c0_i32 = arith.constant 0 : i32
    %c0_i32_0 = arith.constant 0 : i32
    return %arg1, %c0_i32 : i32, i32
  }
  func.func @transform_4(%arg0: i32, %arg1: i32) -> (i32, i32) {
    %c0_i32 = arith.constant 0 : i32
    %c0_i32_0 = arith.constant 0 : i32
    return %c0_i32, %arg1 : i32, i32
  }
  func.func @transform_5(%arg0: i32, %arg1: i32) -> (i32, i32) {
    %c0_i32 = arith.constant 0 : i32
    return %arg0, %arg1 : i32, i32
  }
}

module attributes {stable_mosaic.version = 11 : i64} {
  func.func @_matmul_bias_res_kernel(%arg0: i32, %arg1: i32, %arg2: i32, %arg3: memref<16x64xf32, #tpu.memory_space<vmem>>, %arg4: memref<32x64xf32, #tpu.memory_space<vmem>>, %arg5: memref<1x32xf32, #tpu.memory_space<vmem>>, %arg6: memref<16x32xf32, #tpu.memory_space<vmem>>, %arg7: memref<16x32xf32, #tpu.memory_space<vmem>>, %arg8: memref<16x32xf32, #tpu.memory_space<vmem>>) attributes {dimension_semantics = [#tpu.dimension_semantics<parallel>, #tpu.dimension_semantics<parallel>, #tpu.dimension_semantics<arbitrary>], iteration_bounds = array<i64: 1, 1, 1>, scalar_prefetch = 0 : i64, scratch_operands = 1 : i64, tpu.core_type = #tpu.core_type<tc>, window_params = [{transform_indices = @transform_0, window_bounds = array<i64: 16, 64>}, {transform_indices = @transform_1, window_bounds = array<i64: 32, 64>}, {transform_indices = @transform_2, window_bounds = array<i64: 1, 32>}, {transform_indices = @transform_3, window_bounds = array<i64: 16, 32>}, {transform_indices = @transform_4, window_bounds = array<i64: 16, 32>}]} {
    %c0_i32 = arith.constant 0 : i32
    %0 = arith.cmpi eq, %arg2, %c0_i32 : i32
    %1 = arith.extui %0 : i1 to i32
    %c0_i32_0 = arith.constant 0 : i32
    %2 = arith.cmpi ne, %1, %c0_i32_0 : i32
    scf.if %2 {
      %cst_10 = arith.constant 0.000000e+00 : f32
      %12 = vector.broadcast %cst_10 : f32 to vector<16x32xf32>
      %c0_11 = arith.constant 0 : index
      %c0_12 = arith.constant 0 : index
      %13 = vector.load %arg8[%c0_11, %c0_12] : memref<16x32xf32, #tpu.memory_space<vmem>>, vector<16x32xf32>
      tpu.vector_store %arg8[%c0_11, %c0_12], %12 {strides = array<i32>} : memref<16x32xf32, #tpu.memory_space<vmem>>, vector<16x32xf32>,
    } else {
    }
    %c0 = arith.constant 0 : index
    %c0_1 = arith.constant 0 : index
    %3 = vector.load %arg8[%c0, %c0_1] : memref<16x32xf32, #tpu.memory_space<vmem>>, vector<16x32xf32>
    %c0_2 = arith.constant 0 : index
    %c0_3 = arith.constant 0 : index
    %4 = vector.load %arg3[%c0_2, %c0_3] : memref<16x64xf32, #tpu.memory_space<vmem>>, vector<16x64xf32>
    %c0_4 = arith.constant 0 : index
    %c0_5 = arith.constant 0 : index
    %5 = vector.load %arg4[%c0_4, %c0_5] : memref<32x64xf32, #tpu.memory_space<vmem>>, vector<32x64xf32>
    %cst = arith.constant dense<0.000000e+00> : vector<16x32xf32>
    %6 = tpu.matmul %4, %5, %cst {dimension_numbers = #tpu.dot_dimension_numbers<[1], [1], [0], [0], [0, 0, 1, 0], [], []>} : vector<16x64xf32>, vector<32x64xf32>, vector<16x32xf32> -> vector<16x32xf32>
    %7 = arith.addf %3, %6 : vector<16x32xf32>
    %c0_6 = arith.constant 0 : index
    %c0_7 = arith.constant 0 : index
    %8 = vector.load %arg8[%c0_6, %c0_7] : memref<16x32xf32, #tpu.memory_space<vmem>>, vector<16x32xf32>
    tpu.vector_store %arg8[%c0_6, %c0_7], %7 {strides = array<i32>} : memref<16x32xf32, #tpu.memory_space<vmem>>, vector<16x32xf32>,
    %c0_i32_8 = arith.constant 0 : i32
    %9 = arith.cmpi eq, %arg2, %c0_i32_8 : i32
    %10 = arith.extui %9 : i1 to i32
    %c0_i32_9 = arith.constant 0 : i32
    %11 = arith.cmpi ne, %10, %c0_i32_9 : i32
    scf.if %11 {
      %c0_10 = arith.constant 0 : index
      %c0_11 = arith.constant 0 : index
      %12 = vector.load %arg8[%c0_10, %c0_11] : memref<16x32xf32, #tpu.memory_space<vmem>>, vector<16x32xf32>
      %c0_12 = arith.constant 0 : index
      %c0_13 = arith.constant 0 : index
      %13 = vector.load %arg5[%c0_12, %c0_13] : memref<1x32xf32, #tpu.memory_space<vmem>>, vector<1x32xf32>
      %14 = vector.broadcast %13 : vector<1x32xf32> to vector<16x32xf32>
      %15 = arith.addf %12, %14 : vector<16x32xf32>
      %c0_14 = arith.constant 0 : index
      %c0_15 = arith.constant 0 : index
      %16 = vector.load %arg6[%c0_14, %c0_15] : memref<16x32xf32, #tpu.memory_space<vmem>>, vector<16x32xf32>
      %17 = arith.addf %15, %16 : vector<16x32xf32>
      %c0_16 = arith.constant 0 : index
      %c0_17 = arith.constant 0 : index
      %18 = vector.load %arg7[%c0_16, %c0_17] : memref<16x32xf32, #tpu.memory_space<vmem>>, vector<16x32xf32>
      tpu.vector_store %arg7[%c0_16, %c0_17], %17 {strides = array<i32>} : memref<16x32xf32, #tpu.memory_space<vmem>>, vector<16x32xf32>,
    } else {
    }
    return
  }
  func.func @transform_0(%arg0: i32, %arg1: i32, %arg2: i32) -> (i32, i32) {
    %c0_i32 = arith.constant 0 : i32
    return %arg0, %arg2 : i32, i32
  }
  func.func @transform_1(%arg0: i32, %arg1: i32, %arg2: i32) -> (i32, i32) {
    %c0_i32 = arith.constant 0 : i32
    return %arg1, %arg2 : i32, i32
  }
  func.func @transform_2(%arg0: i32, %arg1: i32, %arg2: i32) -> (i32, i32) {
    %c0_i32 = arith.constant 0 : i32
    %c0_i32_0 = arith.constant 0 : i32
    return %c0_i32, %arg1 : i32, i32
  }
  func.func @transform_3(%arg0: i32, %arg1: i32, %arg2: i32) -> (i32, i32) {
    %c0_i32 = arith.constant 0 : i32
    return %arg0, %arg1 : i32, i32
  }
  func.func @transform_4(%arg0: i32, %arg1: i32, %arg2: i32) -> (i32, i32) {
    %c0_i32 = arith.constant 0 : i32
    return %arg0, %arg1 : i32, i32
  }
}

</mosaic_0001>

<llo_original>
// kernel: cross_transformer.6
$region0: #{cross_transformer.6}
  #allocation0 [shape = 'u32[]', space=smem, size = 0x4, offset = 0x4, fixed_abs, tag = 'smem constant byte address 0x4 - core index']
  #allocation1 [shape = 'u32[72,128]{1,0:T(1,128)}', space=vmem, size = 0x9000, scoped, tag = 'internal scratch']
  %s0 = inlined_call_operand.vmem [shape: f32[16,32], index: 0, kind: input, shape index: {}]
  %s1 = inlined_call_operand.vmem [shape: f32[1,32], index: 1, kind: input, shape index: {}]
  %s2 = inlined_call_operand.vmem [shape: f32[1,32], index: 2, kind: input, shape index: {}]
  %s3 = inlined_call_operand.vmem [shape: f32[1,32], index: 3, kind: input, shape index: {}]
  %s4 = inlined_call_operand.hbm [shape: f32[1,32], index: 4, kind: input, shape index: {}]
  %s5 = inlined_call_operand.hbm [shape: f32[32,32], index: 5, kind: input, shape index: {}]
  %s6 = inlined_call_operand.vmem [shape: f32[16,32], index: 6, kind: output, shape index: {}]
  %s7 = sld [smem:[#allocation0]]
  $region42: #{cross_transformer.6} parent=0
    _
  %s9 = ssub.s32 1, %s7
  %s10 = scalar_select 0, %s9, %s7
  $region1: #{cross_transformer.6} parent=0
    #allocation2 [shape = 'u8[512]{0}', space=vmem, size = 0x400, scoped, tag = 'input window, operand 4, single buffered']
    #allocation3 [shape = 's32[1]{0}', space=sflag, size = 0x4, scoped, tag = 'scoped memory for cross_transformer.6']
    #allocation4 [shape = 'u8[16384]{0}', space=vmem, size = 0x4000, scoped, tag = 'input window, operand 5, single buffered']
    #allocation5 [shape = 's32[1]{0}', space=sflag, size = 0x4, scoped, tag = 'scoped memory for cross_transformer.6']
    %11 = vsyncpa [#allocation3], 0
    %12 = vsyncpa [#allocation5], 0
    // Predicated region
    $region2: #{cross_transformer.6} parent=1 // pred_check
      _
    $region3: #{cross_transformer.6} parent=1 // pred_check_branch
      %14 = sbr.rel (0) target = $region5
    $region4: #{cross_transformer.6} parent=1 // pred_region
      _
    $region5: #{cross_transformer.6} parent=1 // pred_fallthru
      _
    // Predicated region
    $region6: #{cross_transformer.6} parent=1 // pred_check
      _
    $region7: #{cross_transformer.6} parent=1 // pred_check_branch
      %16 = sbr.rel (0) target = $region9
    $region8: #{cross_transformer.6} parent=1 // pred_region
      _
    $region9: #{cross_transformer.6} parent=1 // pred_fallthru
      _
    // Predicated region
    $region10: #{cross_transformer.6} parent=1 // pred_check
      _
    $region11: #{cross_transformer.6} parent=1 // pred_check_branch
      %18 = sbr.rel (0) target = $region13
    $region12: #{cross_transformer.6} parent=1 // pred_region
      _
    $region13: #{cross_transformer.6} parent=1 // pred_fallthru
      _
    // Predicated region
    $region14: #{cross_transformer.6} parent=1 // pred_check
      _
    $region15: #{cross_transformer.6} parent=1 // pred_check_branch
      %20 = sbr.rel (0) target = $region17
    $region16: #{cross_transformer.6} parent=1 // pred_region
      _
    $region17: #{cross_transformer.6} parent=1 // pred_fallthru
      _
    // Predicated region
    $region18: #{cross_transformer.6} parent=1 // pred_check
      _
    $region19: #{cross_transformer.6} parent=1 // pred_check_branch
      %22 = sbr.rel (0) target = $region21
    $region20: #{cross_transformer.6} parent=1 // pred_region
      %24 = vsyncadd [#allocation3], 0
      %s26 = sshll.u32 %s4, 4
      %s27 = int_to_ptr.hbm [resolvable:$true] %s26
      %s28 = sshll.u32 [#allocation2], 4
      %s29 = int_to_ptr.vmem [resolvable:$true] %s28
      %31 = dma.hbm_to_vmem [thread:$0]  %s27, 16, %s29, [#allocation3]
    $region21: #{cross_transformer.6} parent=1 // pred_fallthru
      _
    // Predicated region
    $region22: #{cross_transformer.6} parent=1 // pred_check
      _
    $region23: #{cross_transformer.6} parent=1 // pred_check_branch
      %33 = sbr.rel (0) target = $region25
    $region24: #{cross_transformer.6} parent=1 // pred_region
      %35 = vsyncadd [#allocation5], 0
      %s36 = sshll.u32 %s5, 4
      %s37 = int_to_ptr.hbm [resolvable:$true] %s36
      %s38 = sshll.u32 [#allocation4], 4
      %s39 = int_to_ptr.vmem [resolvable:$true] %s38
      %44 = dma.hbm_to_vmem [thread:$0]  %s37, 512, %s39, [#allocation5], 128, 128, 8
    $region25: #{cross_transformer.6} parent=1 // pred_fallthru
      _
    // Predicated region
    $region26: #{cross_transformer.6} parent=1 // pred_check
      _
    $region27: #{cross_transformer.6} parent=1 // pred_check_branch
      %46 = sbr.rel (0) target = $region29
    $region28: #{cross_transformer.6} parent=1 // pred_region
      %48 = dma.done [#allocation3], 16
    $region29: #{cross_transformer.6} parent=1 // pred_fallthru
      _
    // Predicated region
    $region30: #{cross_transformer.6} parent=1 // pred_check
      _
    $region31: #{cross_transformer.6} parent=1 // pred_check_branch
      %50 = sbr.rel (0) target = $region33
    $region32: #{cross_transformer.6} parent=1 // pred_region
      %52 = dma.done [#allocation5], 512
    $region33: #{cross_transformer.6} parent=1 // pred_fallthru
      _
    %v53 = vld [vmem:[%s0] sm:$0xff]
    %v54 = vld [vmem:[%s0 + $0x8] sm:$0xff]
    %v55 = vld [vmem:[%s1] sm:$0x1]
    %v56 = vld [vmem:[%s2] sm:$0x1]
    %vm57 = vcmask 261120
    %v58 = vsel %vm57, %v53, 0.0
    %59 = vadd.xlane.f32.xlu0 %v58
    %v60 = vpop.xlane.xlu0 %59
    %v61 = vsel %vm57, %v54, 0.0
    %62 = vadd.xlane.f32.xlu0 %v61
    %v63 = vpop.xlane.xlu0 %62
    %v64 = vrcp.pop 32.0
    %v65 = vmul.f32 32.0, %v64
    %v66 = vsub.f32 1.0, %v65
    %v67 = vmul.f32 %v64, %v66
    %v68 = vadd.f32 %v64, %v67
    %vm69 = vweird.f32 %v64
    %v70 = vsel %vm69, %v64, %v68
    %v71 = vmul.f32 %v60, %v70
    %v72 = vmul.f32 %v63, %v70
    %v73 = vsub.f32 %v53, %v71
    %v74 = vsub.f32 %v54, %v72
    %v75 = vmul.f32 %v73, %v73
    %v76 = vmul.f32 %v74, %v74
    %v77 = vsel %vm57, %v75, 0.0
    %78 = vadd.xlane.f32.xlu0 %v77
    %v79 = vpop.xlane.xlu0 %78
    %v80 = vsel %vm57, %v76, 0.0
    %81 = vadd.xlane.f32.xlu0 %v80
    %v82 = vpop.xlane.xlu0 %81
    %v83 = vmul.f32 %v79, %v70
    %v84 = vmul.f32 %v82, %v70
    %v85 = vadd.f32 %v83, 1e-05
    %v86 = vadd.f32 %v84, 1e-05
    %v87 = vrsqrt.pop %v85
    %v88 = vmul.f32 %v87, %v85
    %v89 = vmul.f32 %v88, %v87
    %v90 = vmul.f32 0.5, %v89
    %v91 = vsub.f32 1.5, %v90
    %v92 = vmul.f32 %v87, %v91
    %vm93 = vweird.f32 %v85
    %vm94 = vweird.f32 %v87
    %vm95 = vmor %vm93, %vm94
    %v96 = vsel %vm95, %v87, %v92
    %v97 = vrsqrt.pop %v86
    %v98 = vmul.f32 %v97, %v86
    %v99 = vmul.f32 %v98, %v97
    %v100 = vmul.f32 0.5, %v99
    %v101 = vsub.f32 1.5, %v100
    %v102 = vmul.f32 %v97, %v101
    %vm103 = vweird.f32 %v86
    %vm104 = vweird.f32 %v97
    %vm105 = vmor %vm103, %vm104
    %v106 = vsel %vm105, %v97, %v102
    %v107 = vmul.f32 %v73, %v96
    %v108 = vmul.f32 %v74, %v106
    %v110 = vperm.slane %v55, 0
    %v112 = vmul.f32 %v107, %v110
    %v113 = vmul.f32 %v108, %v110
    %v115 = vperm.slane %v56, 0
    %v117 = vadd.f32 %v112, %v115
    %v118 = vadd.f32 %v113, %v115
    %v119 = vld [vmem:[%s3] sm:$0x1]
    %v120 = vld [vmem:[#allocation2] sm:$0x1]
    %v121 = vsel %vm57, %v117, 0.0
    %122 = vadd.xlane.f32.xlu0 %v121
    %v123 = vpop.xlane.xlu0 %122
    %v124 = vsel %vm57, %v118, 0.0
    %125 = vadd.xlane.f32.xlu0 %v124
    %v126 = vpop.xlane.xlu0 %125
    %v127 = vmul.f32 %v123, %v70
    %v128 = vmul.f32 %v126, %v70
    %v129 = vsub.f32 %v117, %v127
    %v130 = vsub.f32 %v118, %v128
    %v131 = vmul.f32 %v129, %v129
    %v132 = vmul.f32 %v130, %v130
    %v133 = vsel %vm57, %v131, 0.0
    %134 = vadd.xlane.f32.xlu0 %v133
    %v135 = vpop.xlane.xlu0 %134
    %v136 = vsel %vm57, %v132, 0.0
    %137 = vadd.xlane.f32.xlu0 %v136
    %v138 = vpop.xlane.xlu0 %137
    %v139 = vmul.f32 %v135, %v70
    %v140 = vmul.f32 %v138, %v70
    %v141 = vadd.f32 %v139, 1e-05
    %v142 = vadd.f32 %v140, 1e-05
    %v143 = vrsqrt.pop %v141
    %v144 = vmul.f32 %v143, %v141
    %v145 = vmul.f32 %v144, %v143
    %v146 = vmul.f32 0.5, %v145
    %v147 = vsub.f32 1.5, %v146
    %v148 = vmul.f32 %v143, %v147
    %vm149 = vweird.f32 %v141
    %vm150 = vweird.f32 %v143
    %vm151 = vmor %vm149, %vm150
    %v152 = vsel %vm151, %v143, %v148
    %v153 = vrsqrt.pop %v142
    %v154 = vmul.f32 %v153, %v142
    %v155 = vmul.f32 %v154, %v153
    %v156 = vmul.f32 0.5, %v155
    %v157 = vsub.f32 1.5, %v156
    %v158 = vmul.f32 %v153, %v157
    %vm159 = vweird.f32 %v142
    %vm160 = vweird.f32 %v153
    %vm161 = vmor %vm159, %vm160
    %v162 = vsel %vm161, %v153, %v158
    %v163 = vmul.f32 %v129, %v152
    %v164 = vmul.f32 %v130, %v162
    %v166 = vperm.slane %v119, 0
    %v168 = vmul.f32 %v163, %v166
    %v169 = vmul.f32 %v164, %v166
    %v171 = vperm.slane %v120, 0
    %v173 = vadd.f32 %v168, %v171
    %v174 = vadd.f32 %v169, %v171
    %v175 = vld [vmem:[#allocation4] sm:$0xff]
    %v176 = vld [vmem:[#allocation4 + $0x8] sm:$0xff]
    %v177 = vld [vmem:[#allocation4 + $0x10] sm:$0xff]
    %v178 = vld [vmem:[#allocation4 + $0x18] sm:$0xff]
    %v180 = vsel %vm57, %v173, 0
    %v183 = vsel %vm57, %v174, 0
    %v186 = vsel %vm57, %v175, 0
    %v189 = vsel %vm57, %v176, 0
    %v192 = vsel %vm57, %v177, 0
    %v195 = vsel %vm57, %v178, 0
    %197 = vmatpush.xpose.msra.mxu0 0.0
    %198 = vmatpush.xpose.msra.mxu0 0.0
    %199 = vmatpush.xpose.msra.mxu0 0.0
    %200 = vmatpush.xpose.msra.mxu0 0.0
    %201 = vmatpush.xpose.msra.mxu0 0.0
    %202 = vmatpush.xpose.msra.mxu0 0.0
    %203 = vmatpush.xpose.msra.mxu0 0.0
    %204 = vmatpush.xpose.msra.mxu0 0.0
    %205 = vmatpush.xpose.msra.mxu0 0.0
    %206 = vmatpush.xpose.msra.mxu0 0.0
    %207 = vmatpush.xpose.msra.mxu0 0.0
    %208 = vmatpush.xpose.msra.mxu0 0.0
    %209 = vmatpush.xpose.msra.mxu0 %v195
    %210 = vmatpush.xpose.msra.mxu0 %v192
    %211 = vmatpush.xpose.msra.mxu0 %v189
    %212 = vmatpush.xpose.msra.mxu0 %v186
    %213 = vmatmul.f32.gmra.mxu0 %v180
    %v214 = vpop.f32.mrf.mxu0
    %v215 = vadd.f32 0.0, %v214
    %216 = vmatmul.f32.gmra.mxu0 %v183
    %v217 = vpop.f32.mrf.mxu0
    %v218 = vadd.f32 0.0, %v217
    %219 = vdwg.mxu0
    %220 = vst.msk [vmem:[%s6] sm:$0xff] %vm57, %v215
    %221 = vst.msk [vmem:[%s6 + $0x8] sm:$0xff] %vm57, %v218
    // Predicated region
    $region34: #{cross_transformer.6} parent=1 // pred_check
      _
    $region35: #{cross_transformer.6} parent=1 // pred_check_branch
      %223 = sbr.rel (0) target = $region37
    $region36: #{cross_transformer.6} parent=1 // pred_region
      _
    $region37: #{cross_transformer.6} parent=1 // pred_fallthru
      _
    // Predicated region
    $region38: #{cross_transformer.6} parent=1 // pred_check
      _
    $region39: #{cross_transformer.6} parent=1 // pred_check_branch
      %225 = sbr.rel (0) target = $region41
    $region40: #{cross_transformer.6} parent=1 // pred_region
      _
    $region41: #{cross_transformer.6} parent=1 // pred_fallthru
      _
    %226 = vsyncpa [#allocation3], 1
    %227 = vsyncpa [#allocation5], 1

// kernel: cross_transformer.8
$region0: #{cross_transformer.8}
  #allocation0 [shape = 'u32[]', space=smem, size = 0x4, offset = 0x4, fixed_abs, tag = 'smem constant byte address 0x4 - core index']
  #allocation1 [shape = 'u32[72,128]{1,0:T(1,128)}', space=vmem, size = 0x9000, scoped, tag = 'internal scratch']
  %s0 = inlined_call_operand.vmem [shape: f32[2,8,32], index: 0, kind: input, shape index: {}]
  %s1 = inlined_call_operand.vmem [shape: f32[2,16,64], index: 1, kind: input, shape index: {}]
  %s2 = inlined_call_operand.vmem [shape: f32[2,8,32], index: 2, kind: output, shape index: {}]
  %s3 = sld [smem:[#allocation0]]
  $region41: #{cross_transformer.8} parent=0
    _
  %s5 = ssub.s32 1, %s3
  %s6 = scalar_select 0, %s5, %s3
  loop: start=0, step=1, limit=4
  $region2: #{cross_transformer.8} parent=0 // loop_pre_header
    _
  $region3: #{cross_transformer.8} parent=0 // loop_header
    %s8 = sphi 0, %s12
    %p9 = scmp.ge.s32.totalorder %s8, 4
    %s18 = sphi 0, %s20
    %s21 = sphi 0, %s18
    %s22 = sphi 0, %s21
    %s38 = sphi 0, %s22
    %s44 = sphi 0, %s46
    %s47 = sphi 0, %s44
    %s48 = sphi 0, %s47
    %s64 = sphi 0, %s48
    %s70 = sphi 0, %s72
    %s73 = sphi 0, %s70
    %s74 = sphi 0, %s73
    %s90 = sphi 0, %s74
  $region4: #{cross_transformer.8} parent=0 // loop_header_branch
    %11 = sbr.rel (%p9) target = $region8
  $region5: #{cross_transformer.8} parent=0 // loop_body
    %s13 = ssub.s32 %s8, 1
    %s14 = ssub.s32 %s8, 2
    %s15 = sadd.s32 %s8, 1
    %s16 = ssub.s32 %s8, %s15
    %p17 = scmp.eq.s32.totalorder %s16, 0
    %s19 = sadd.s32 %s18, 1
    %s20 = scalar_select %p17, %s18, %s19
    %p23 = pneg %p17
    %p24 = scmp.eq.s32.totalorder %s8, 1
    %p25 = por %p23, %p24
    %p26 = scmp.ne.s32.totalorder %s18, %s21
    %p27 = scmp.eq.s32.totalorder %s8, 0
    %p28 = por %p26, %p27
    %p29 = scmp.ne.s32.totalorder %s18, %s21
    %p30 = scmp.eq.s32.totalorder %s13, 1
    %p31 = por %p29, %p30
    %p32 = scmp.ne.s32.totalorder %s21, %s22
    %p33 = scmp.eq.s32.totalorder %s13, 0
    %p34 = por %p32, %p33
    %p35 = scmp.ne.s32.totalorder %s21, %s22
    %p36 = scmp.eq.s32.totalorder %s14, 1
    %p37 = por %p35, %p36
    %p39 = scmp.ne.s32.totalorder %s22, %s38
    %p40 = scmp.eq.s32.totalorder %s14, 0
    %p41 = por %p39, %p40
    %s42 = ssub.s32 %s8, %s15
    %p43 = scmp.eq.s32.totalorder %s42, 0
    %s45 = sadd.s32 %s44, 1
    %s46 = scalar_select %p43, %s44, %s45
    %p49 = pneg %p43
    %p50 = scmp.eq.s32.totalorder %s8, 1
    %p51 = por %p49, %p50
    %p52 = scmp.ne.s32.totalorder %s44, %s47
    %p53 = scmp.eq.s32.totalorder %s8, 0
    %p54 = por %p52, %p53
    %p55 = scmp.ne.s32.totalorder %s44, %s47
    %p56 = scmp.eq.s32.totalorder %s13, 1
    %p57 = por %p55, %p56
    %p58 = scmp.ne.s32.totalorder %s47, %s48
    %p59 = scmp.eq.s32.totalorder %s13, 0
    %p60 = por %p58, %p59
    %p61 = scmp.ne.s32.totalorder %s47, %s48
    %p62 = scmp.eq.s32.totalorder %s14, 1
    %p63 = por %p61, %p62
    %p65 = scmp.ne.s32.totalorder %s48, %s64
    %p66 = scmp.eq.s32.totalorder %s14, 0
    %p67 = por %p65, %p66
    %s68 = ssub.s32 %s8, %s15
    %p69 = scmp.eq.s32.totalorder %s68, 0
    %s71 = sadd.s32 %s70, 1
    %s72 = scalar_select %p69, %s70, %s71
    %p75 = pneg %p69
    %p76 = scmp.eq.s32.totalorder %s8, 1
    %p77 = por %p75, %p76
    %p78 = scmp.ne.s32.totalorder %s70, %s73
    %p79 = scmp.eq.s32.totalorder %s8, 0
    %p80 = por %p78, %p79
    %p81 = scmp.ne.s32.totalorder %s70, %s73
    %p82 = scmp.eq.s32.totalorder %s13, 1
    %p83 = por %p81, %p82
    %p84 = scmp.ne.s32.totalorder %s73, %s74
    %p85 = scmp.eq.s32.totalorder %s13, 0
    %p86 = por %p84, %p85
    %p87 = scmp.ne.s32.totalorder %s73, %s74
    %p88 = scmp.eq.s32.totalorder %s14, 1
    %p89 = por %p87, %p88
    %p91 = scmp.ne.s32.totalorder %s74, %s90
    %p92 = scmp.eq.s32.totalorder %s14, 0
    %p93 = por %p91, %p92
    %p94 = scmp.le.s32.totalorder 1, %s8
    %p95 = scmp.lt.s32.totalorder %s8, 3
    %p96 = pnand %p94, %p95
    %p97 = pneg %p96
    // Predicated region
    $region9: #{cross_transformer.8} parent=5 // pred_check
      _
    $region10: #{cross_transformer.8} parent=5 // pred_check_branch
      %99 = sbr.rel (%p96) target = $region12
    $region11: #{cross_transformer.8} parent=5 // pred_region
      %s100 = ssub.s32 %s8, 1
    $region12: #{cross_transformer.8} parent=5 // pred_fallthru
      _
    %p101 = scmp.lt.s32.totalorder %s8, 2
    // Predicated region
    $region13: #{cross_transformer.8} parent=5 // pred_check
      %p102 = pneg %p101
    $region14: #{cross_transformer.8} parent=5 // pred_check_branch
      %104 = sbr.rel (%p102) target = $region16
    $region15: #{cross_transformer.8} parent=5 // pred_region
      // Predicated region
      $region17: #{cross_transformer.8} parent=15 // pred_check
        %p105 = pneg %p28
      $region18: #{cross_transformer.8} parent=15 // pred_check_branch
        %107 = sbr.rel (%p105) target = $region20
      $region19: #{cross_transformer.8} parent=15 // pred_region
        %p108 = scmp.lt.s32.totalorder %s8, 1
        %s109 = scalar_select %p108, %s8, 1
        %s110 = smul.addr %s109, 8
        %s111 = scalar_lea.vmem %s0, %s110
      $region20: #{cross_transformer.8} parent=15 // pred_fallthru
        _
      // Predicated region
      $region21: #{cross_transformer.8} parent=15 // pred_check
        %p112 = pneg %p54
      $region22: #{cross_transformer.8} parent=15 // pred_check_branch
        %114 = sbr.rel (%p112) target = $region24
      $region23: #{cross_transformer.8} parent=15 // pred_region
        %p115 = scmp.lt.s32.totalorder %s8, 1
        %s116 = scalar_select %p115, %s8, 1
        %s117 = smul.addr %s116, 2
        %s118 = smul.addr %s117, 8
        %s119 = scalar_lea.vmem %s1, %s118
      $region24: #{cross_transformer.8} parent=15 // pred_fallthru
        _
    $region16: #{cross_transformer.8} parent=5 // pred_fallthru
      _
    %p120 = scmp.le.s32.totalorder 1, %s8
    %p121 = scmp.lt.s32.totalorder %s8, 3
    %p122 = pnand %p120, %p121
    %p123 = pneg %p122
    // Predicated region
    $region25: #{cross_transformer.8} parent=5 // pred_check
      _
    $region26: #{cross_transformer.8} parent=5 // pred_check_branch
      %125 = sbr.rel (%p122) target = $region28
    $region27: #{cross_transformer.8} parent=5 // pred_region
      %s126 = ssub.s32 %s8, 1
      %p127 = scmp.lt.s32.totalorder %s13, 1
      %s128 = scalar_select %p127, %s13, 1
      %s129 = smul.addr %s128, 8
      %s130 = scalar_lea.vmem %s0, %s129
      %p131 = pneg %p34
      %p132 = pneg %p31
      %p133 = scmp.lt.s32.totalorder %s13, 1
      %s134 = scalar_select %p133, %s13, 1
      %s135 = smul.addr %s134, 2
      %s136 = smul.addr %s135, 8
      %s137 = scalar_lea.vmem %s1, %s136
      %p138 = pneg %p60
      %p139 = pneg %p57
      %p140 = pneg %p86
      %p141 = pneg %p83
      %p142 = scmp.lt.s32.totalorder %s13, 1
      %s143 = scalar_select %p142, %s13, 1
      %s144 = smul.addr %s143, 8
      %s145 = scalar_lea.vmem %s2, %s144
      %p146 = scmp.lt.s32.totalorder %s13, 1
      %s147 = scalar_select %p146, %s13, 1
      %s148 = smul.addr %s147, 8
      %s149 = scalar_lea.vmem %s0, %s148
      %p150 = scmp.lt.s32.totalorder %s13, 1
      %s151 = scalar_select %p150, %s13, 1
      %s152 = smul.addr %s151, 2
      %s153 = smul.addr %s152, 8
      %s154 = scalar_lea.vmem %s1, %s153
      %p155 = scmp.lt.s32.totalorder %s13, 1
      %s156 = scalar_select %p155, %s13, 1
      %s157 = smul.addr %s156, 8
      %s158 = scalar_lea.vmem %s2, %s157
      %v159 = vld [vmem:[%s149] sm:$0xff]
      %v160 = vld [vmem:[%s154] sm:$0xff]
      %v161 = vld [vmem:[%s154 + $0x8] sm:$0xff]
      %v162 = vmul.f32 %v159, 0.25
      %vm163 = vcmask 130048
      %v165 = vsel %vm163, %v162, 0
      %v168 = vsel %vm163, %v160, 0
      %v171 = vsel %vm163, %v161, 0
      %173 = vmatpush.xpose.msra.mxu0 0.0
      %174 = vmatpush.xpose.msra.mxu0 0.0
      %175 = vmatpush.xpose.msra.mxu0 0.0
      %176 = vmatpush.xpose.msra.mxu0 0.0
      %177 = vmatpush.xpose.msra.mxu0 0.0
      %178 = vmatpush.xpose.msra.mxu0 0.0
      %179 = vmatpush.xpose.msra.mxu0 0.0
      %180 = vmatpush.xpose.msra.mxu0 0.0
      %181 = vmatpush.xpose.msra.mxu0 0.0
      %182 = vmatpush.xpose.msra.mxu0 0.0
      %183 = vmatpush.xpose.msra.mxu0 0.0
      %184 = vmatpush.xpose.msra.mxu0 0.0
      %185 = vmatpush.xpose.msra.mxu0 0.0
      %186 = vmatpush.xpose.msra.mxu0 0.0
      %187 = vmatpush.xpose.msra.mxu0 %v171
      %188 = vmatpush.xpose.msra.mxu0 %v168
      %189 = vmatmul.f32.gmra.mxu0 %v165
      %v190 = vpop.f32.mrf.mxu0
      %v191 = vadd.f32 0.0, %v190
      %192 = vdwg.mxu0
      %v193 = vsel %vm163, %v191, -inf
      %194 = vmax.xlane.f32.xlu0 %v193
      %v195 = vpop.xlane.xlu0 %194
      %v196 = vsub.f32 %v191, %v195
      %v197 = vmul.f32 %v196, 1.442695
      %v198 = vpow.pop %v197
      %v199 = vsel %vm163, %v198, 0.0
      %200 = vadd.xlane.f32.xlu0 %v199
      %v201 = vpop.xlane.xlu0 %200
      %v202 = vrcp.pop %v201
      %v203 = vmul.f32 %v201, %v202
      %v204 = vsub.f32 1.0, %v203
      %v205 = vmul.f32 %v202, %v204
      %v206 = vadd.f32 %v202, %v205
      %vm207 = vweird.f32 %v201
      %vm208 = vweird.f32 %v202
      %vm209 = vmor %vm207, %vm208
      %v210 = vsel %vm209, %v202, %v206
      %v211 = vand.u32 2147483647, %v201
      %vm212 = vcmp.eq.f32.partialorder %v211, 8.507059e+37
      %v213 = vand.u32 %v201, 2147483648
      %v214 = vor.u32 1.1754944e-38, %v213
      %v215 = vsel %vm212, %v214, %v210
      %v216 = vmul.f32 %v198, %v215
      %217 = vrot.lane.b32.xlu0 %v160, 96
      %v218 = vpop.permute.xlu0 %217
      %219 = vrot.lane.b32.xlu0 %v161, 96
      %v220 = vpop.permute.xlu0 %219
      %v224 = vsel %vm163, %v216, 0
      %226 = vmatpush.msra.mxu0 0.0
      %227 = vmatpush.msra.mxu0 0.0
      %228 = vmatpush.msra.mxu0 0.0
      %229 = vmatpush.msra.mxu0 0.0
      %230 = vmatpush.msra.mxu0 0.0
      %231 = vmatpush.msra.mxu0 0.0
      %232 = vmatpush.msra.mxu0 0.0
      %233 = vmatpush.msra.mxu0 0.0
      %234 = vmatpush.msra.mxu0 0.0
      %235 = vmatpush.msra.mxu0 0.0
      %236 = vmatpush.msra.mxu0 0.0
      %237 = vmatpush.msra.mxu0 0.0
      %238 = vmatpush.msra.mxu0 0.0
      %239 = vmatpush.msra.mxu0 0.0
      %240 = vmatpush.msra.mxu0 %v220
      %241 = vmatpush.msra.mxu0 %v218
      %242 = vmatmul.f32.gmra.mxu0 %v224
      %v243 = vpop.f32.mrf.mxu0
      %v244 = vadd.f32 0.0, %v243
      %245 = vdwg.mxu0
      %246 = vrot.lane.b32.xlu0 %v162, 112
      %v247 = vpop.permute.xlu0 %246
      %248 = vrot.lane.b32.xlu0 %v160, 112
      %v249 = vpop.permute.xlu0 %248
      %250 = vrot.lane.b32.xlu0 %v161, 112
      %v251 = vpop.permute.xlu0 %250
      %v252 = vsel %vm163, %v247, 0
      %v254 = vsel %vm163, %v249, 0
      %v256 = vsel %vm163, %v251, 0
      %258 = vmatpush.xpose.msra.mxu0 0.0
      %259 = vmatpush.xpose.msra.mxu0 0.0
      %260 = vmatpush.xpose.msra.mxu0 0.0
      %261 = vmatpush.xpose.msra.mxu0 0.0
      %262 = vmatpush.xpose.msra.mxu0 0.0
      %263 = vmatpush.xpose.msra.mxu0 0.0
      %264 = vmatpush.xpose.msra.mxu0 0.0
      %265 = vmatpush.xpose.msra.mxu0 0.0
      %266 = vmatpush.xpose.msra.mxu0 0.0
      %267 = vmatpush.xpose.msra.mxu0 0.0
      %268 = vmatpush.xpose.msra.mxu0 0.0
      %269 = vmatpush.xpose.msra.mxu0 0.0
      %270 = vmatpush.xpose.msra.mxu0 0.0
      %271 = vmatpush.xpose.msra.mxu0 0.0
      %272 = vmatpush.xpose.msra.mxu0 %v256
      %273 = vmatpush.xpose.msra.mxu0 %v254
      %274 = vmatmul.f32.gmra.mxu0 %v252
      %v275 = vpop.f32.mrf.mxu0
      %v276 = vadd.f32 0.0, %v275
      %277 = vdwg.mxu0
      %v278 = vsel %vm163, %v276, -inf
      %279 = vmax.xlane.f32.xlu0 %v278
      %v280 = vpop.xlane.xlu0 %279
      %v281 = vsub.f32 %v276, %v280
      %v282 = vmul.f32 %v281, 1.442695
      %v283 = vpow.pop %v282
      %v284 = vsel %vm163, %v283, 0.0
      %285 = vadd.xlane.f32.xlu0 %v284
      %v286 = vpop.xlane.xlu0 %285
      %v287 = vrcp.pop %v286
      %v288 = vmul.f32 %v286, %v287
      %v289 = vsub.f32 1.0, %v288
      %v290 = vmul.f32 %v287, %v289
      %v291 = vadd.f32 %v287, %v290
      %vm292 = vweird.f32 %v286
      %vm293 = vweird.f32 %v287
      %vm294 = vmor %vm292, %vm293
      %v295 = vsel %vm294, %v287, %v291
      %v296 = vand.u32 2147483647, %v286
      %vm297 = vcmp.eq.f32.partialorder %v296, 8.507059e+37
      %v298 = vand.u32 %v286, 2147483648
      %v299 = vor.u32 1.1754944e-38, %v298
      %v300 = vsel %vm297, %v299, %v295
      %v301 = vmul.f32 %v283, %v300
      %302 = vrot.lane.b32.xlu0 %v160, 80
      %v303 = vpop.permute.xlu0 %302
      %304 = vrot.lane.b32.xlu0 %v161, 80
      %v305 = vpop.permute.xlu0 %304
      %v309 = vsel %vm163, %v301, 0
      %311 = vmatpush.msra.mxu0 0.0
      %312 = vmatpush.msra.mxu0 0.0
      %313 = vmatpush.msra.mxu0 0.0
      %314 = vmatpush.msra.mxu0 0.0
      %315 = vmatpush.msra.mxu0 0.0
      %316 = vmatpush.msra.mxu0 0.0
      %317 = vmatpush.msra.mxu0 0.0
      %318 = vmatpush.msra.mxu0 0.0
      %319 = vmatpush.msra.mxu0 0.0
      %320 = vmatpush.msra.mxu0 0.0
      %321 = vmatpush.msra.mxu0 0.0
      %322 = vmatpush.msra.mxu0 0.0
      %323 = vmatpush.msra.mxu0 0.0
      %324 = vmatpush.msra.mxu0 0.0
      %325 = vmatpush.msra.mxu0 %v305
      %326 = vmatpush.msra.mxu0 %v303
      %327 = vmatmul.f32.gmra.mxu0 %v309
      %v328 = vpop.f32.mrf.mxu0
      %v329 = vadd.f32 0.0, %v328
      %330 = vdwg.mxu0
      %332 = vrot.lane.b32.xlu0 %v329, 16
      %v333 = vpop.permute.xlu0 %332
      %v335 = vsel %vm163, %v244, %v333
      %vm336 = vcmask 261120
      %337 = vst.msk [vmem:[%s158] sm:$0xff] %vm336, %v335
      %p338 = scmp.lt.s32.totalorder %s13, 1
      %s339 = scalar_select %p338, %s13, 1
      %s340 = smul.addr %s339, 8
      %s341 = scalar_lea.vmem %s2, %s340
      // Predicated region
      $region29: #{cross_transformer.8} parent=27 // pred_check
        %p342 = pneg %p83
      $region30: #{cross_transformer.8} parent=27 // pred_check_branch
        %344 = sbr.rel (%p342) target = $region32
      $region31: #{cross_transformer.8} parent=27 // pred_region
        _
      $region32: #{cross_transformer.8} parent=27 // pred_fallthru
        _
    $region28: #{cross_transformer.8} parent=5 // pred_fallthru
      _
    %p345 = scmp.le.s32.totalorder 2, %s8
    // Predicated region
    $region33: #{cross_transformer.8} parent=5 // pred_check
      %p346 = pneg %p345
    $region34: #{cross_transformer.8} parent=5 // pred_check_branch
      %348 = sbr.rel (%p346) target = $region36
    $region35: #{cross_transformer.8} parent=5 // pred_region
      %s349 = ssub.s32 %s8, 2
      // Predicated region
      $region37: #{cross_transformer.8} parent=35 // pred_check
        %p350 = pneg %p89
      $region38: #{cross_transformer.8} parent=35 // pred_check_branch
        %352 = sbr.rel (%p350) target = $region40
      $region39: #{cross_transformer.8} parent=35 // pred_region
        %p353 = scmp.lt.s32.totalorder %s14, 1
        %s354 = scalar_select %p353, %s14, 1
        %s355 = smul.addr %s354, 8
        %s356 = scalar_lea.vmem %s2, %s355
      $region40: #{cross_transformer.8} parent=35 // pred_fallthru
        _
    $region36: #{cross_transformer.8} parent=5 // pred_fallthru
      _
  $region6: #{cross_transformer.8} parent=0 // loop_footer
    %s12 = sadd.s32 1, %s8
  $region7: #{cross_transformer.8} parent=0 // loop_footer_branch
    %7 = sbr.rel target = $region3
  $region8: #{cross_transformer.8} parent=0 // loop_exit
    _

// kernel: cross_transformer.7
$region0: #{cross_transformer.7}
  #allocation0 [shape = 'u32[]', space=smem, size = 0x4, offset = 0x4, fixed_abs, tag = 'smem constant byte address 0x4 - core index']
  #allocation1 [shape = 'u32[72,128]{1,0:T(1,128)}', space=vmem, size = 0x9000, scoped, tag = 'internal scratch']
  %s0 = inlined_call_operand.vmem [shape: f32[32,32], index: 0, kind: input, shape index: {}]
  %s1 = inlined_call_operand.vmem [shape: f32[1,32], index: 1, kind: input, shape index: {}]
  %s2 = inlined_call_operand.vmem [shape: f32[1,32], index: 2, kind: input, shape index: {}]
  %s3 = inlined_call_operand.vmem [shape: f32[1,32], index: 3, kind: input, shape index: {}]
  %s4 = inlined_call_operand.vmem [shape: f32[1,32], index: 4, kind: input, shape index: {}]
  %s5 = inlined_call_operand.vmem [shape: f32[64,32], index: 5, kind: input, shape index: {}]
  %s6 = inlined_call_operand.vmem [shape: f32[32,64], index: 6, kind: output, shape index: {}]
  %s7 = sld [smem:[#allocation0]]
  $region34: #{cross_transformer.7} parent=0
    _
  %s9 = ssub.s32 1, %s7
  %s10 = scalar_select 0, %s9, %s7
  // Predicated region
  $region2: #{cross_transformer.7} parent=0 // pred_check
    _
  $region3: #{cross_transformer.7} parent=0 // pred_check_branch
    %12 = sbr.rel (0) target = $region5
  $region4: #{cross_transformer.7} parent=0 // pred_region
    _
  $region5: #{cross_transformer.7} parent=0 // pred_fallthru
    _
  // Predicated region
  $region6: #{cross_transformer.7} parent=0 // pred_check
    _
  $region7: #{cross_transformer.7} parent=0 // pred_check_branch
    %14 = sbr.rel (0) target = $region9
  $region8: #{cross_transformer.7} parent=0 // pred_region
    _
  $region9: #{cross_transformer.7} parent=0 // pred_fallthru
    _
  // Predicated region
  $region10: #{cross_transformer.7} parent=0 // pred_check
    _
  $region11: #{cross_transformer.7} parent=0 // pred_check_branch
    %16 = sbr.rel (0) target = $region13
  $region12: #{cross_transformer.7} parent=0 // pred_region
    _
  $region13: #{cross_transformer.7} parent=0 // pred_fallthru
    _
  // Predicated region
  $region14: #{cross_transformer.7} parent=0 // pred_check
    _
  $region15: #{cross_transformer.7} parent=0 // pred_check_branch
    %18 = sbr.rel (0) target = $region17
  $region16: #{cross_transformer.7} parent=0 // pred_region
    _
  $region17: #{cross_transformer.7} parent=0 // pred_fallthru
    _
  // Predicated region
  $region18: #{cross_transformer.7} parent=0 // pred_check
    _
  $region19: #{cross_transformer.7} parent=0 // pred_check_branch
    %20 = sbr.rel (0) target = $region21
  $region20: #{cross_transformer.7} parent=0 // pred_region
    _
  $region21: #{cross_transformer.7} parent=0 // pred_fallthru
    _
  // Predicated region
  $region22: #{cross_transformer.7} parent=0 // pred_check
    _
  $region23: #{cross_transformer.7} parent=0 // pred_check_branch
    %22 = sbr.rel (0) target = $region25
  $region24: #{cross_transformer.7} parent=0 // pred_region
    _
  $region25: #{cross_transformer.7} parent=0 // pred_fallthru
    _
  %v23 = vld [vmem:[%s0] sm:$0xff]
  %v24 = vld [vmem:[%s0 + $0x8] sm:$0xff]
  %v25 = vld [vmem:[%s0 + $0x10] sm:$0xff]
  %v26 = vld [vmem:[%s0 + $0x18] sm:$0xff]
  %v27 = vld [vmem:[%s1] sm:$0x1]
  %v28 = vld [vmem:[%s2] sm:$0x1]
  %vm29 = vcmask 261120
  %v30 = vsel %vm29, %v23, 0.0
  %31 = vadd.xlane.f32.xlu0 %v30
  %v32 = vpop.xlane.xlu0 %31
  %v33 = vsel %vm29, %v24, 0.0
  %34 = vadd.xlane.f32.xlu0 %v33
  %v35 = vpop.xlane.xlu0 %34
  %v36 = vsel %vm29, %v25, 0.0
  %37 = vadd.xlane.f32.xlu0 %v36
  %v38 = vpop.xlane.xlu0 %37
  %v39 = vsel %vm29, %v26, 0.0
  %40 = vadd.xlane.f32.xlu0 %v39
  %v41 = vpop.xlane.xlu0 %40
  %v42 = vrcp.pop 32.0
  %v43 = vmul.f32 32.0, %v42
  %v44 = vsub.f32 1.0, %v43
  %v45 = vmul.f32 %v42, %v44
  %v46 = vadd.f32 %v42, %v45
  %vm47 = vweird.f32 %v42
  %v48 = vsel %vm47, %v42, %v46
  %v49 = vmul.f32 %v32, %v48
  %v50 = vmul.f32 %v35, %v48
  %v51 = vmul.f32 %v38, %v48
  %v52 = vmul.f32 %v41, %v48
  %v53 = vsub.f32 %v23, %v49
  %v54 = vsub.f32 %v24, %v50
  %v55 = vsub.f32 %v25, %v51
  %v56 = vsub.f32 %v26, %v52
  %v57 = vmul.f32 %v53, %v53
  %v58 = vmul.f32 %v54, %v54
  %v59 = vmul.f32 %v55, %v55
  %v60 = vmul.f32 %v56, %v56
  %v61 = vsel %vm29, %v57, 0.0
  %62 = vadd.xlane.f32.xlu0 %v61
  %v63 = vpop.xlane.xlu0 %62
  %v64 = vsel %vm29, %v58, 0.0
  %65 = vadd.xlane.f32.xlu0 %v64
  %v66 = vpop.xlane.xlu0 %65
  %v67 = vsel %vm29, %v59, 0.0
  %68 = vadd.xlane.f32.xlu0 %v67
  %v69 = vpop.xlane.xlu0 %68
  %v70 = vsel %vm29, %v60, 0.0
  %71 = vadd.xlane.f32.xlu0 %v70
  %v72 = vpop.xlane.xlu0 %71
  %v73 = vmul.f32 %v63, %v48
  %v74 = vmul.f32 %v66, %v48
  %v75 = vmul.f32 %v69, %v48
  %v76 = vmul.f32 %v72, %v48
  %v77 = vadd.f32 %v73, 1e-05
  %v78 = vadd.f32 %v74, 1e-05
  %v79 = vadd.f32 %v75, 1e-05
  %v80 = vadd.f32 %v76, 1e-05
  %v81 = vrsqrt.pop %v77
  %v82 = vmul.f32 %v81, %v77
  %v83 = vmul.f32 %v82, %v81
  %v84 = vmul.f32 0.5, %v83
  %v85 = vsub.f32 1.5, %v84
  %v86 = vmul.f32 %v81, %v85
  %vm87 = vweird.f32 %v77
  %vm88 = vweird.f32 %v81
  %vm89 = vmor %vm87, %vm88
  %v90 = vsel %vm89, %v81, %v86
  %v91 = vrsqrt.pop %v78
  %v92 = vmul.f32 %v91, %v78
  %v93 = vmul.f32 %v92, %v91
  %v94 = vmul.f32 0.5, %v93
  %v95 = vsub.f32 1.5, %v94
  %v96 = vmul.f32 %v91, %v95
  %vm97 = vweird.f32 %v78
  %vm98 = vweird.f32 %v91
  %vm99 = vmor %vm97, %vm98
  %v100 = vsel %vm99, %v91, %v96
  %v101 = vrsqrt.pop %v79
  %v102 = vmul.f32 %v101, %v79
  %v103 = vmul.f32 %v102, %v101
  %v104 = vmul.f32 0.5, %v103
  %v105 = vsub.f32 1.5, %v104
  %v106 = vmul.f32 %v101, %v105
  %vm107 = vweird.f32 %v79
  %vm108 = vweird.f32 %v101
  %vm109 = vmor %vm107, %vm108
  %v110 = vsel %vm109, %v101, %v106
  %v111 = vrsqrt.pop %v80
  %v112 = vmul.f32 %v111, %v80
  %v113 = vmul.f32 %v112, %v111
  %v114 = vmul.f32 0.5, %v113
  %v115 = vsub.f32 1.5, %v114
  %v116 = vmul.f32 %v111, %v115
  %vm117 = vweird.f32 %v80
  %vm118 = vweird.f32 %v111
  %vm119 = vmor %vm117, %vm118
  %v120 = vsel %vm119, %v111, %v116
  %v121 = vmul.f32 %v53, %v90
  %v122 = vmul.f32 %v54, %v100
  %v123 = vmul.f32 %v55, %v110
  %v124 = vmul.f32 %v56, %v120
  %v126 = vperm.slane %v27, 0
  %v128 = vmul.f32 %v121, %v126
  %v129 = vmul.f32 %v122, %v126
  %v130 = vmul.f32 %v123, %v126
  %v131 = vmul.f32 %v124, %v126
  %v133 = vperm.slane %v28, 0
  %v135 = vadd.f32 %v128, %v133
  %v136 = vadd.f32 %v129, %v133
  %v137 = vadd.f32 %v130, %v133
  %v138 = vadd.f32 %v131, %v133
  %v139 = vld [vmem:[%s3] sm:$0x1]
  %v140 = vld [vmem:[%s4] sm:$0x1]
  %v141 = vsel %vm29, %v135, 0.0
  %142 = vadd.xlane.f32.xlu0 %v141
  %v143 = vpop.xlane.xlu0 %142
  %v144 = vsel %vm29, %v136, 0.0
  %145 = vadd.xlane.f32.xlu0 %v144
  %v146 = vpop.xlane.xlu0 %145
  %v147 = vsel %vm29, %v137, 0.0
  %148 = vadd.xlane.f32.xlu0 %v147
  %v149 = vpop.xlane.xlu0 %148
  %v150 = vsel %vm29, %v138, 0.0
  %151 = vadd.xlane.f32.xlu0 %v150
  %v152 = vpop.xlane.xlu0 %151
  %v153 = vmul.f32 %v143, %v48
  %v154 = vmul.f32 %v146, %v48
  %v155 = vmul.f32 %v149, %v48
  %v156 = vmul.f32 %v152, %v48
  %v157 = vsub.f32 %v135, %v153
  %v158 = vsub.f32 %v136, %v154
  %v159 = vsub.f32 %v137, %v155
  %v160 = vsub.f32 %v138, %v156
  %v161 = vmul.f32 %v157, %v157
  %v162 = vmul.f32 %v158, %v158
  %v163 = vmul.f32 %v159, %v159
  %v164 = vmul.f32 %v160, %v160
  %v165 = vsel %vm29, %v161, 0.0
  %166 = vadd.xlane.f32.xlu0 %v165
  %v167 = vpop.xlane.xlu0 %166
  %v168 = vsel %vm29, %v162, 0.0
  %169 = vadd.xlane.f32.xlu0 %v168
  %v170 = vpop.xlane.xlu0 %169
  %v171 = vsel %vm29, %v163, 0.0
  %172 = vadd.xlane.f32.xlu0 %v171
  %v173 = vpop.xlane.xlu0 %172
  %v174 = vsel %vm29, %v164, 0.0
  %175 = vadd.xlane.f32.xlu0 %v174
  %v176 = vpop.xlane.xlu0 %175
  %v177 = vmul.f32 %v167, %v48
  %v178 = vmul.f32 %v170, %v48
  %v179 = vmul.f32 %v173, %v48
  %v180 = vmul.f32 %v176, %v48
  %v181 = vadd.f32 %v177, 1e-05
  %v182 = vadd.f32 %v178, 1e-05
  %v183 = vadd.f32 %v179, 1e-05
  %v184 = vadd.f32 %v180, 1e-05
  %v185 = vrsqrt.pop %v181
  %v186 = vmul.f32 %v185, %v181
  %v187 = vmul.f32 %v186, %v185
  %v188 = vmul.f32 0.5, %v187
  %v189 = vsub.f32 1.5, %v188
  %v190 = vmul.f32 %v185, %v189
  %vm191 = vweird.f32 %v181
  %vm192 = vweird.f32 %v185
  %vm193 = vmor %vm191, %vm192
  %v194 = vsel %vm193, %v185, %v190
  %v195 = vrsqrt.pop %v182
  %v196 = vmul.f32 %v195, %v182
  %v197 = vmul.f32 %v196, %v195
  %v198 = vmul.f32 0.5, %v197
  %v199 = vsub.f32 1.5, %v198
  %v200 = vmul.f32 %v195, %v199
  %vm201 = vweird.f32 %v182
  %vm202 = vweird.f32 %v195
  %vm203 = vmor %vm201, %vm202
  %v204 = vsel %vm203, %v195, %v200
  %v205 = vrsqrt.pop %v183
  %v206 = vmul.f32 %v205, %v183
  %v207 = vmul.f32 %v206, %v205
  %v208 = vmul.f32 0.5, %v207
  %v209 = vsub.f32 1.5, %v208
  %v210 = vmul.f32 %v205, %v209
  %vm211 = vweird.f32 %v183
  %vm212 = vweird.f32 %v205
  %vm213 = vmor %vm211, %vm212
  %v214 = vsel %vm213, %v205, %v210
  %v215 = vrsqrt.pop %v184
  %v216 = vmul.f32 %v215, %v184
  %v217 = vmul.f32 %v216, %v215
  %v218 = vmul.f32 0.5, %v217
  %v219 = vsub.f32 1.5, %v218
  %v220 = vmul.f32 %v215, %v219
  %vm221 = vweird.f32 %v184
  %vm222 = vweird.f32 %v215
  %vm223 = vmor %vm221, %vm222
  %v224 = vsel %vm223, %v215, %v220
  %v225 = vmul.f32 %v157, %v194
  %v226 = vmul.f32 %v158, %v204
  %v227 = vmul.f32 %v159, %v214
  %v228 = vmul.f32 %v160, %v224
  %v230 = vperm.slane %v139, 0
  %v232 = vmul.f32 %v225, %v230
  %v233 = vmul.f32 %v226, %v230
  %v234 = vmul.f32 %v227, %v230
  %v235 = vmul.f32 %v228, %v230
  %v237 = vperm.slane %v140, 0
  %v239 = vadd.f32 %v232, %v237
  %v240 = vadd.f32 %v233, %v237
  %v241 = vadd.f32 %v234, %v237
  %v242 = vadd.f32 %v235, %v237
  %v243 = vld [vmem:[%s5] sm:$0xff]
  %v244 = vld [vmem:[%s5 + $0x8] sm:$0xff]
  %v245 = vld [vmem:[%s5 + $0x10] sm:$0xff]
  %v246 = vld [vmem:[%s5 + $0x18] sm:$0xff]
  %v247 = vld [vmem:[%s5 + $0x20] sm:$0xff]
  %v248 = vld [vmem:[%s5 + $0x28] sm:$0xff]
  %v249 = vld [vmem:[%s5 + $0x30] sm:$0xff]
  %v250 = vld [vmem:[%s5 + $0x38] sm:$0xff]
  %v252 = vsel %vm29, %v239, 0
  %v255 = vsel %vm29, %v240, 0
  %v258 = vsel %vm29, %v241, 0
  %v261 = vsel %vm29, %v242, 0
  %v264 = vsel %vm29, %v243, 0
  %v267 = vsel %vm29, %v244, 0
  %v270 = vsel %vm29, %v245, 0
  %v273 = vsel %vm29, %v246, 0
  %v276 = vsel %vm29, %v247, 0
  %v279 = vsel %vm29, %v248, 0
  %v282 = vsel %vm29, %v249, 0
  %v285 = vsel %vm29, %v250, 0
  %287 = vmatpush.xpose.msra.mxu0 0.0
  %288 = vmatpush.xpose.msra.mxu0 0.0
  %289 = vmatpush.xpose.msra.mxu0 0.0
  %290 = vmatpush.xpose.msra.mxu0 0.0
  %291 = vmatpush.xpose.msra.mxu0 0.0
  %292 = vmatpush.xpose.msra.mxu0 0.0
  %293 = vmatpush.xpose.msra.mxu0 0.0
  %294 = vmatpush.xpose.msra.mxu0 0.0
  %295 = vmatpush.xpose.msra.mxu0 %v285
  %296 = vmatpush.xpose.msra.mxu0 %v282
  %297 = vmatpush.xpose.msra.mxu0 %v279
  %298 = vmatpush.xpose.msra.mxu0 %v276
  %299 = vmatpush.xpose.msra.mxu0 %v273
  %300 = vmatpush.xpose.msra.mxu0 %v270
  %301 = vmatpush.xpose.msra.mxu0 %v267
  %302 = vmatpush.xpose.msra.mxu0 %v264
  %303 = vmatmul.f32.gmra.mxu0 %v252
  %v304 = vpop.f32.mrf.mxu0
  %v305 = vadd.f32 0.0, %v304
  %306 = vmatmul.f32.gmra.mxu0 %v255
  %v307 = vpop.f32.mrf.mxu0
  %v308 = vadd.f32 0.0, %v307
  %309 = vmatmul.f32.gmra.mxu0 %v258
  %v310 = vpop.f32.mrf.mxu0
  %v311 = vadd.f32 0.0, %v310
  %312 = vmatmul.f32.gmra.mxu0 %v261
  %v313 = vpop.f32.mrf.mxu0
  %v314 = vadd.f32 0.0, %v313
  %315 = vdwg.mxu0
  %vm316 = vcmask 523264
  %317 = vst.msk [vmem:[%s6] sm:$0xff] %vm316, %v305
  %318 = vst.msk [vmem:[%s6 + $0x8] sm:$0xff] %vm316, %v308
  %319 = vst.msk [vmem:[%s6 + $0x10] sm:$0xff] %vm316, %v311
  %320 = vst.msk [vmem:[%s6 + $0x18] sm:$0xff] %vm316, %v314
  // Predicated region
  $region26: #{cross_transformer.7} parent=0 // pred_check
    _
  $region27: #{cross_transformer.7} parent=0 // pred_check_branch
    %322 = sbr.rel (0) target = $region29
  $region28: #{cross_transformer.7} parent=0 // pred_region
    _
  $region29: #{cross_transformer.7} parent=0 // pred_fallthru
    _
  // Predicated region
  $region30: #{cross_transformer.7} parent=0 // pred_check
    _
  $region31: #{cross_transformer.7} parent=0 // pred_check_branch
    %324 = sbr.rel (0) target = $region33
  $region32: #{cross_transformer.7} parent=0 // pred_region
    _
  $region33: #{cross_transformer.7} parent=0 // pred_fallthru
    _

// kernel: cross_transformer.9
$region0: #{cross_transformer.9}
  #allocation0 [shape = 'u32[]', space=smem, size = 0x4, offset = 0x4, fixed_abs, tag = 'smem constant byte address 0x4 - core index']
  #allocation1 [shape = 'u32[72,128]{1,0:T(1,128)}', space=vmem, size = 0x9000, scoped, tag = 'internal scratch']
  #allocation2 [shape = 'f32[16,32]{1,0:T(8,128)}', space=vmem, size = 0x2000, scoped, tag = 'scratch operand']
  %s0 = inlined_call_operand.vmem [shape: f32[16,32], index: 0, kind: input, shape index: {}]
  %s1 = inlined_call_operand.vmem [shape: f32[32,32], index: 1, kind: input, shape index: {}]
  %s2 = inlined_call_operand.vmem [shape: f32[1,32], index: 2, kind: input, shape index: {}]
  %s3 = inlined_call_operand.vmem [shape: f32[16,32], index: 3, kind: input, shape index: {}]
  %s4 = inlined_call_operand.vmem [shape: f32[16,32], index: 4, kind: output, shape index: {}]
  %s5 = sld [smem:[#allocation0]]
  $region34: #{cross_transformer.9} parent=0
    _
  %s7 = ssub.s32 1, %s5
  %s8 = scalar_select 0, %s7, %s5
  // Predicated region
  $region2: #{cross_transformer.9} parent=0 // pred_check
    _
  $region3: #{cross_transformer.9} parent=0 // pred_check_branch
    %10 = sbr.rel (0) target = $region5
  $region4: #{cross_transformer.9} parent=0 // pred_region
    _
  $region5: #{cross_transformer.9} parent=0 // pred_fallthru
    _
  // Predicated region
  $region6: #{cross_transformer.9} parent=0 // pred_check
    _
  $region7: #{cross_transformer.9} parent=0 // pred_check_branch
    %12 = sbr.rel (0) target = $region9
  $region8: #{cross_transformer.9} parent=0 // pred_region
    _
  $region9: #{cross_transformer.9} parent=0 // pred_fallthru
    _
  // Predicated region
  $region10: #{cross_transformer.9} parent=0 // pred_check
    _
  $region11: #{cross_transformer.9} parent=0 // pred_check_branch
    %14 = sbr.rel (0) target = $region13
  $region12: #{cross_transformer.9} parent=0 // pred_region
    _
  $region13: #{cross_transformer.9} parent=0 // pred_fallthru
    _
  // Predicated region
  $region14: #{cross_transformer.9} parent=0 // pred_check
    _
  $region15: #{cross_transformer.9} parent=0 // pred_check_branch
    %16 = sbr.rel (0) target = $region17
  $region16: #{cross_transformer.9} parent=0 // pred_region
    _
  $region17: #{cross_transformer.9} parent=0 // pred_fallthru
    _
  %p17 = scmp.eq.s32.totalorder 0, 0
  // Predicated region
  $region18: #{cross_transformer.9} parent=0 // pred_check
    %p18 = pneg %p17
  $region19: #{cross_transformer.9} parent=0 // pred_check_branch
    %20 = sbr.rel (%p18) target = $region21
  $region20: #{cross_transformer.9} parent=0 // pred_region
    %vm21 = vcmask 261120
    %22 = vst.msk [vmem:[#allocation2] sm:$0xff] %vm21, 0.0
    %23 = vst.msk [vmem:[#allocation2 + $0x8] sm:$0xff] %vm21, 0.0
  $region21: #{cross_transformer.9} parent=0 // pred_fallthru
    _
  %v24 = vld [vmem:[#allocation2] sm:$0xff]
  %v25 = vld [vmem:[#allocation2 + $0x8] sm:$0xff]
  %v26 = vld [vmem:[%s0] sm:$0xff]
  %v27 = vld [vmem:[%s0 + $0x8] sm:$0xff]
  %v28 = vld [vmem:[%s1] sm:$0xff]
  %v29 = vld [vmem:[%s1 + $0x8] sm:$0xff]
  %v30 = vld [vmem:[%s1 + $0x10] sm:$0xff]
  %v31 = vld [vmem:[%s1 + $0x18] sm:$0xff]
  %vm32 = vcmask 261120
  %v34 = vsel %vm32, %v26, 0
  %v37 = vsel %vm32, %v27, 0
  %v40 = vsel %vm32, %v28, 0
  %v43 = vsel %vm32, %v29, 0
  %v46 = vsel %vm32, %v30, 0
  %v49 = vsel %vm32, %v31, 0
  %51 = vmatpush.xpose.msra.mxu0 0.0
  %52 = vmatpush.xpose.msra.mxu0 0.0
  %53 = vmatpush.xpose.msra.mxu0 0.0
  %54 = vmatpush.xpose.msra.mxu0 0.0
  %55 = vmatpush.xpose.msra.mxu0 0.0
  %56 = vmatpush.xpose.msra.mxu0 0.0
  %57 = vmatpush.xpose.msra.mxu0 0.0
  %58 = vmatpush.xpose.msra.mxu0 0.0
  %59 = vmatpush.xpose.msra.mxu0 0.0
  %60 = vmatpush.xpose.msra.mxu0 0.0
  %61 = vmatpush.xpose.msra.mxu0 0.0
  %62 = vmatpush.xpose.msra.mxu0 0.0
  %63 = vmatpush.xpose.msra.mxu0 %v49
  %64 = vmatpush.xpose.msra.mxu0 %v46
  %65 = vmatpush.xpose.msra.mxu0 %v43
  %66 = vmatpush.xpose.msra.mxu0 %v40
  %67 = vmatmul.f32.gmra.mxu0 %v34
  %v68 = vpop.f32.mrf.mxu0
  %v69 = vadd.f32 0.0, %v68
  %70 = vmatmul.f32.gmra.mxu0 %v37
  %v71 = vpop.f32.mrf.mxu0
  %v72 = vadd.f32 0.0, %v71
  %73 = vdwg.mxu0
  %v74 = vadd.f32 %v24, %v69
  %v75 = vadd.f32 %v25, %v72
  %76 = vst.msk [vmem:[#allocation2] sm:$0xff] %vm32, %v74
  %77 = vst.msk [vmem:[#allocation2 + $0x8] sm:$0xff] %vm32, %v75
  // Predicated region
  $region22: #{cross_transformer.9} parent=0 // pred_check
    %p78 = pneg %p17
  $region23: #{cross_transformer.9} parent=0 // pred_check_branch
    %80 = sbr.rel (%p78) target = $region25
  $region24: #{cross_transformer.9} parent=0 // pred_region
    %v81 = vld [vmem:[#allocation2] sm:$0xff]
    %v82 = vld [vmem:[#allocation2 + $0x8] sm:$0xff]
    %v83 = vld [vmem:[%s2] sm:$0x1]
    %v85 = vperm.slane %v83, 0
    %v87 = vadd.f32 %v81, %v85
    %v88 = vadd.f32 %v82, %v85
    %v89 = vld [vmem:[%s3] sm:$0xff]
    %v90 = vld [vmem:[%s3 + $0x8] sm:$0xff]
    %v91 = vadd.f32 %v87, %v89
    %v92 = vadd.f32 %v88, %v90
    %93 = vst.msk [vmem:[%s4] sm:$0xff] %vm32, %v91
    %94 = vst.msk [vmem:[%s4 + $0x8] sm:$0xff] %vm32, %v92
  $region25: #{cross_transformer.9} parent=0 // pred_fallthru
    _
  // Predicated region
  $region26: #{cross_transformer.9} parent=0 // pred_check
    _
  $region27: #{cross_transformer.9} parent=0 // pred_check_branch
    %96 = sbr.rel (0) target = $region29
  $region28: #{cross_transformer.9} parent=0 // pred_region
    _
  $region29: #{cross_transformer.9} parent=0 // pred_fallthru
    _
  // Predicated region
  $region30: #{cross_transformer.9} parent=0 // pred_check
    _
  $region31: #{cross_transformer.9} parent=0 // pred_check_branch
    %98 = sbr.rel (0) target = $region33
  $region32: #{cross_transformer.9} parent=0 // pred_region
    _
  $region33: #{cross_transformer.9} parent=0 // pred_fallthru
    _

// kernel: cross_transformer.11
$region0: #{cross_transformer.11}
  #allocation0 [shape = 'u32[]', space=smem, size = 0x4, offset = 0x4, fixed_abs, tag = 'smem constant byte address 0x4 - core index']
  #allocation1 [shape = 'u32[72,128]{1,0:T(1,128)}', space=vmem, size = 0x9000, scoped, tag = 'internal scratch']
  #allocation2 [shape = 'f32[16,32]{1,0:T(8,128)}', space=vmem, size = 0x2000, scoped, tag = 'scratch operand']
  %s0 = inlined_call_operand.vmem [shape: f32[16,64], index: 0, kind: input, shape index: {}]
  %s1 = inlined_call_operand.vmem [shape: f32[32,64], index: 1, kind: input, shape index: {}]
  %s2 = inlined_call_operand.vmem [shape: f32[1,32], index: 2, kind: input, shape index: {}]
  %s3 = inlined_call_operand.vmem [shape: f32[16,32], index: 3, kind: input, shape index: {}]
  %s4 = inlined_call_operand.hbm [shape: f32[16,32], index: 4, kind: output, shape index: {}]
  %s5 = sld [smem:[#allocation0]]
  $region34: #{cross_transformer.11} parent=0
    _
  %s7 = ssub.s32 1, %s5
  %s8 = scalar_select 0, %s7, %s5
  $region1: #{cross_transformer.11} parent=0
    #allocation3 [shape = 'u8[8192]{0}', space=vmem, size = 0x2000, scoped, tag = 'output window, operand 0, single buffered']
    #allocation4 [shape = 's32[1]{0}', space=sflag, size = 0x4, scoped, tag = 'scoped memory for cross_transformer.11']
    %9 = vsyncpa [#allocation4], 0
    // Predicated region
    $region2: #{cross_transformer.11} parent=1 // pred_check
      _
    $region3: #{cross_transformer.11} parent=1 // pred_check_branch
      %11 = sbr.rel (0) target = $region5
    $region4: #{cross_transformer.11} parent=1 // pred_region
      _
    $region5: #{cross_transformer.11} parent=1 // pred_fallthru
      _
    // Predicated region
    $region6: #{cross_transformer.11} parent=1 // pred_check
      _
    $region7: #{cross_transformer.11} parent=1 // pred_check_branch
      %13 = sbr.rel (0) target = $region9
    $region8: #{cross_transformer.11} parent=1 // pred_region
      _
    $region9: #{cross_transformer.11} parent=1 // pred_fallthru
      _
    // Predicated region
    $region10: #{cross_transformer.11} parent=1 // pred_check
      _
    $region11: #{cross_transformer.11} parent=1 // pred_check_branch
      %15 = sbr.rel (0) target = $region13
    $region12: #{cross_transformer.11} parent=1 // pred_region
      _
    $region13: #{cross_transformer.11} parent=1 // pred_fallthru
      _
    // Predicated region
    $region14: #{cross_transformer.11} parent=1 // pred_check
      _
    $region15: #{cross_transformer.11} parent=1 // pred_check_branch
      %17 = sbr.rel (0) target = $region17
    $region16: #{cross_transformer.11} parent=1 // pred_region
      _
    $region17: #{cross_transformer.11} parent=1 // pred_fallthru
      _
    %p18 = scmp.eq.s32.totalorder 0, 0
    // Predicated region
    $region18: #{cross_transformer.11} parent=1 // pred_check
      %p19 = pneg %p18
    $region19: #{cross_transformer.11} parent=1 // pred_check_branch
      %21 = sbr.rel (%p19) target = $region21
    $region20: #{cross_transformer.11} parent=1 // pred_region
      %vm22 = vcmask 261120
      %23 = vst.msk [vmem:[#allocation2] sm:$0xff] %vm22, 0.0
      %24 = vst.msk [vmem:[#allocation2 + $0x8] sm:$0xff] %vm22, 0.0
    $region21: #{cross_transformer.11} parent=1 // pred_fallthru
      _
    %v25 = vld [vmem:[#allocation2] sm:$0xff]
    %v26 = vld [vmem:[#allocation2 + $0x8] sm:$0xff]
    %v27 = vld [vmem:[%s0] sm:$0xff]
    %v28 = vld [vmem:[%s0 + $0x8] sm:$0xff]
    %v29 = vld [vmem:[%s1] sm:$0xff]
    %v30 = vld [vmem:[%s1 + $0x8] sm:$0xff]
    %v31 = vld [vmem:[%s1 + $0x10] sm:$0xff]
    %v32 = vld [vmem:[%s1 + $0x18] sm:$0xff]
    %vm33 = vcmask 523264
    %v35 = vsel %vm33, %v27, 0
    %v38 = vsel %vm33, %v28, 0
    %v41 = vsel %vm33, %v29, 0
    %v44 = vsel %vm33, %v30, 0
    %v47 = vsel %vm33, %v31, 0
    %v50 = vsel %vm33, %v32, 0
    %52 = vmatpush.xpose.msra.mxu0 0.0
    %53 = vmatpush.xpose.msra.mxu0 0.0
    %54 = vmatpush.xpose.msra.mxu0 0.0
    %55 = vmatpush.xpose.msra.mxu0 0.0
    %56 = vmatpush.xpose.msra.mxu0 0.0
    %57 = vmatpush.xpose.msra.mxu0 0.0
    %58 = vmatpush.xpose.msra.mxu0 0.0
    %59 = vmatpush.xpose.msra.mxu0 0.0
    %60 = vmatpush.xpose.msra.mxu0 0.0
    %61 = vmatpush.xpose.msra.mxu0 0.0
    %62 = vmatpush.xpose.msra.mxu0 0.0
    %63 = vmatpush.xpose.msra.mxu0 0.0
    %64 = vmatpush.xpose.msra.mxu0 %v50
    %65 = vmatpush.xpose.msra.mxu0 %v47
    %66 = vmatpush.xpose.msra.mxu0 %v44
    %67 = vmatpush.xpose.msra.mxu0 %v41
    %68 = vmatmul.f32.gmra.mxu0 %v35
    %v69 = vpop.f32.mrf.mxu0
    %v70 = vadd.f32 0.0, %v69
    %71 = vmatmul.f32.gmra.mxu0 %v38
    %v72 = vpop.f32.mrf.mxu0
    %v73 = vadd.f32 0.0, %v72
    %74 = vdwg.mxu0
    %v75 = vadd.f32 %v25, %v70
    %v76 = vadd.f32 %v26, %v73
    %vm77 = vcmask 261120
    %78 = vst.msk [vmem:[#allocation2] sm:$0xff] %vm77, %v75
    %79 = vst.msk [vmem:[#allocation2 + $0x8] sm:$0xff] %vm77, %v76
    // Predicated region
    $region22: #{cross_transformer.11} parent=1 // pred_check
      %p80 = pneg %p18
    $region23: #{cross_transformer.11} parent=1 // pred_check_branch
      %82 = sbr.rel (%p80) target = $region25
    $region24: #{cross_transformer.11} parent=1 // pred_region
      %v83 = vld [vmem:[#allocation2] sm:$0xff]
      %v84 = vld [vmem:[#allocation2 + $0x8] sm:$0xff]
      %v85 = vld [vmem:[%s2] sm:$0x1]
      %v87 = vperm.slane %v85, 0
      %v89 = vadd.f32 %v83, %v87
      %v90 = vadd.f32 %v84, %v87
      %v91 = vld [vmem:[%s3] sm:$0xff]
      %v92 = vld [vmem:[%s3 + $0x8] sm:$0xff]
      %v93 = vadd.f32 %v89, %v91
      %v94 = vadd.f32 %v90, %v92
      %95 = vst.msk [vmem:[#allocation3] sm:$0xff] %vm77, %v93
      %96 = vst.msk [vmem:[#allocation3 + $0x8] sm:$0xff] %vm77, %v94
    $region25: #{cross_transformer.11} parent=1 // pred_fallthru
      _
    // Predicated region
    $region26: #{cross_transformer.11} parent=1 // pred_check
      _
    $region27: #{cross_transformer.11} parent=1 // pred_check_branch
      %98 = sbr.rel (0) target = $region29
    $region28: #{cross_transformer.11} parent=1 // pred_region
      %100 = vsyncadd [#allocation4], 0
      %s101 = sshll.u32 [#allocation3], 4
      %s102 = int_to_ptr.vmem [resolvable:$true] %s101
      %s103 = sshll.u32 %s4, 4
      %s104 = int_to_ptr.hbm [resolvable:$true] %s103
      %109 = dma.vmem_to_hbm [thread:$0]  %s102, 256, %s104, [#allocation4], 128, 128, 8
    $region29: #{cross_transformer.11} parent=1 // pred_fallthru
      _
    // Predicated region
    $region30: #{cross_transformer.11} parent=1 // pred_check
      _
    $region31: #{cross_transformer.11} parent=1 // pred_check_branch
      %111 = sbr.rel (0) target = $region33
    $region32: #{cross_transformer.11} parent=1 // pred_region
      %113 = dma.done [#allocation4], 256
    $region33: #{cross_transformer.11} parent=1 // pred_fallthru
      _
    %114 = vsyncpa [#allocation4], 1

// kernel: cross_transformer.10
$region0: #{cross_transformer.10}
  #allocation0 [shape = 'u32[]', space=smem, size = 0x4, offset = 0x4, fixed_abs, tag = 'smem constant byte address 0x4 - core index']
  #allocation1 [shape = 'u32[72,128]{1,0:T(1,128)}', space=vmem, size = 0x9000, scoped, tag = 'internal scratch']
  %s0 = inlined_call_operand.vmem [shape: f32[16,32], index: 0, kind: input, shape index: {}]
  %s1 = inlined_call_operand.vmem [shape: f32[1,32], index: 1, kind: input, shape index: {}]
  %s2 = inlined_call_operand.vmem [shape: f32[1,32], index: 2, kind: input, shape index: {}]
  %s3 = inlined_call_operand.vmem [shape: f32[64,32], index: 3, kind: input, shape index: {}]
  %s4 = inlined_call_operand.vmem [shape: f32[1,64], index: 4, kind: input, shape index: {}]
  %s5 = inlined_call_operand.vmem [shape: f32[16,64], index: 5, kind: output, shape index: {}]
  %s6 = sld [smem:[#allocation0]]
  $region30: #{cross_transformer.10} parent=0
    _
  %s8 = ssub.s32 1, %s6
  %s9 = scalar_select 0, %s8, %s6
  // Predicated region
  $region2: #{cross_transformer.10} parent=0 // pred_check
    _
  $region3: #{cross_transformer.10} parent=0 // pred_check_branch
    %11 = sbr.rel (0) target = $region5
  $region4: #{cross_transformer.10} parent=0 // pred_region
    _
  $region5: #{cross_transformer.10} parent=0 // pred_fallthru
    _
  // Predicated region
  $region6: #{cross_transformer.10} parent=0 // pred_check
    _
  $region7: #{cross_transformer.10} parent=0 // pred_check_branch
    %13 = sbr.rel (0) target = $region9
  $region8: #{cross_transformer.10} parent=0 // pred_region
    _
  $region9: #{cross_transformer.10} parent=0 // pred_fallthru
    _
  // Predicated region
  $region10: #{cross_transformer.10} parent=0 // pred_check
    _
  $region11: #{cross_transformer.10} parent=0 // pred_check_branch
    %15 = sbr.rel (0) target = $region13
  $region12: #{cross_transformer.10} parent=0 // pred_region
    _
  $region13: #{cross_transformer.10} parent=0 // pred_fallthru
    _
  // Predicated region
  $region14: #{cross_transformer.10} parent=0 // pred_check
    _
  $region15: #{cross_transformer.10} parent=0 // pred_check_branch
    %17 = sbr.rel (0) target = $region17
  $region16: #{cross_transformer.10} parent=0 // pred_region
    _
  $region17: #{cross_transformer.10} parent=0 // pred_fallthru
    _
  // Predicated region
  $region18: #{cross_transformer.10} parent=0 // pred_check
    _
  $region19: #{cross_transformer.10} parent=0 // pred_check_branch
    %19 = sbr.rel (0) target = $region21
  $region20: #{cross_transformer.10} parent=0 // pred_region
    _
  $region21: #{cross_transformer.10} parent=0 // pred_fallthru
    _
  %v20 = vld [vmem:[%s0] sm:$0xff]
  %v21 = vld [vmem:[%s0 + $0x8] sm:$0xff]
  %v22 = vld [vmem:[%s1] sm:$0x1]
  %v23 = vld [vmem:[%s2] sm:$0x1]
  %vm24 = vcmask 261120
  %v25 = vsel %vm24, %v20, 0.0
  %26 = vadd.xlane.f32.xlu0 %v25
  %v27 = vpop.xlane.xlu0 %26
  %v28 = vsel %vm24, %v21, 0.0
  %29 = vadd.xlane.f32.xlu0 %v28
  %v30 = vpop.xlane.xlu0 %29
  %v31 = vrcp.pop 32.0
  %v32 = vmul.f32 32.0, %v31
  %v33 = vsub.f32 1.0, %v32
  %v34 = vmul.f32 %v31, %v33
  %v35 = vadd.f32 %v31, %v34
  %vm36 = vweird.f32 %v31
  %v37 = vsel %vm36, %v31, %v35
  %v38 = vmul.f32 %v27, %v37
  %v39 = vmul.f32 %v30, %v37
  %v40 = vsub.f32 %v20, %v38
  %v41 = vsub.f32 %v21, %v39
  %v42 = vmul.f32 %v40, %v40
  %v43 = vmul.f32 %v41, %v41
  %v44 = vsel %vm24, %v42, 0.0
  %45 = vadd.xlane.f32.xlu0 %v44
  %v46 = vpop.xlane.xlu0 %45
  %v47 = vsel %vm24, %v43, 0.0
  %48 = vadd.xlane.f32.xlu0 %v47
  %v49 = vpop.xlane.xlu0 %48
  %v50 = vmul.f32 %v46, %v37
  %v51 = vmul.f32 %v49, %v37
  %v52 = vadd.f32 %v50, 1e-05
  %v53 = vadd.f32 %v51, 1e-05
  %v54 = vrsqrt.pop %v52
  %v55 = vmul.f32 %v54, %v52
  %v56 = vmul.f32 %v55, %v54
  %v57 = vmul.f32 0.5, %v56
  %v58 = vsub.f32 1.5, %v57
  %v59 = vmul.f32 %v54, %v58
  %vm60 = vweird.f32 %v52
  %vm61 = vweird.f32 %v54
  %vm62 = vmor %vm60, %vm61
  %v63 = vsel %vm62, %v54, %v59
  %v64 = vrsqrt.pop %v53
  %v65 = vmul.f32 %v64, %v53
  %v66 = vmul.f32 %v65, %v64
  %v67 = vmul.f32 0.5, %v66
  %v68 = vsub.f32 1.5, %v67
  %v69 = vmul.f32 %v64, %v68
  %vm70 = vweird.f32 %v53
  %vm71 = vweird.f32 %v64
  %vm72 = vmor %vm70, %vm71
  %v73 = vsel %vm72, %v64, %v69
  %v74 = vmul.f32 %v40, %v63
  %v75 = vmul.f32 %v41, %v73
  %v77 = vperm.slane %v22, 0
  %v79 = vmul.f32 %v74, %v77
  %v80 = vmul.f32 %v75, %v77
  %v82 = vperm.slane %v23, 0
  %v84 = vadd.f32 %v79, %v82
  %v85 = vadd.f32 %v80, %v82
  %v86 = vld [vmem:[%s3] sm:$0xff]
  %v87 = vld [vmem:[%s3 + $0x8] sm:$0xff]
  %v88 = vld [vmem:[%s3 + $0x10] sm:$0xff]
  %v89 = vld [vmem:[%s3 + $0x18] sm:$0xff]
  %v90 = vld [vmem:[%s3 + $0x20] sm:$0xff]
  %v91 = vld [vmem:[%s3 + $0x28] sm:$0xff]
  %v92 = vld [vmem:[%s3 + $0x30] sm:$0xff]
  %v93 = vld [vmem:[%s3 + $0x38] sm:$0xff]
  %v94 = vld [vmem:[%s4] sm:$0x1]
  %v96 = vperm.slane %v94, 0
  %v99 = vsel %vm24, %v84, 0
  %v102 = vsel %vm24, %v85, 0
  %v105 = vsel %vm24, %v86, 0
  %v108 = vsel %vm24, %v87, 0
  %v111 = vsel %vm24, %v88, 0
  %v114 = vsel %vm24, %v89, 0
  %v117 = vsel %vm24, %v90, 0
  %v120 = vsel %vm24, %v91, 0
  %v123 = vsel %vm24, %v92, 0
  %v126 = vsel %vm24, %v93, 0
  %128 = vmatpush.xpose.msra.mxu0 0.0
  %129 = vmatpush.xpose.msra.mxu0 0.0
  %130 = vmatpush.xpose.msra.mxu0 0.0
  %131 = vmatpush.xpose.msra.mxu0 0.0
  %132 = vmatpush.xpose.msra.mxu0 0.0
  %133 = vmatpush.xpose.msra.mxu0 0.0
  %134 = vmatpush.xpose.msra.mxu0 0.0
  %135 = vmatpush.xpose.msra.mxu0 0.0
  %136 = vmatpush.xpose.msra.mxu0 %v126
  %137 = vmatpush.xpose.msra.mxu0 %v123
  %138 = vmatpush.xpose.msra.mxu0 %v120
  %139 = vmatpush.xpose.msra.mxu0 %v117
  %140 = vmatpush.xpose.msra.mxu0 %v114
  %141 = vmatpush.xpose.msra.mxu0 %v111
  %142 = vmatpush.xpose.msra.mxu0 %v108
  %143 = vmatpush.xpose.msra.mxu0 %v105
  %144 = vmatmul.f32.gmra.mxu0 %v99
  %v145 = vpop.f32.mrf.mxu0
  %v146 = vadd.f32 %v96, %v145
  %147 = vmatmul.f32.gmra.mxu0 %v102
  %v148 = vpop.f32.mrf.mxu0
  %v149 = vadd.f32 %v96, %v148
  %150 = vdwg.mxu0
  %v151 = vmul.f32 %v146, 0.5
  %v152 = vmul.f32 %v149, 0.5
  %v153 = vmul.f32 %v146, 0.70710677
  %v154 = vmul.f32 %v149, 0.70710677
  %v155 = vand.u32 2147483647, %v153
  %v156 = vand.u32 2147483647, %v154
  %v157 = vmul.f32 %v155, 0.3275911
  %v158 = vmul.f32 %v156, 0.3275911
  %v159 = vadd.f32 %v157, 1.0
  %v160 = vadd.f32 %v158, 1.0
  %v161 = vrcp.pop %v159
  %v162 = vmul.f32 %v159, %v161
  %v163 = vsub.f32 1.0, %v162
  %v164 = vmul.f32 %v161, %v163
  %v165 = vadd.f32 %v161, %v164
  %vm166 = vweird.f32 %v159
  %vm167 = vweird.f32 %v161
  %vm168 = vmor %vm166, %vm167
  %v169 = vsel %vm168, %v161, %v165
  %v170 = vand.u32 2147483647, %v159
  %vm171 = vcmp.eq.f32.partialorder %v170, 8.507059e+37
  %v172 = vand.u32 %v159, 2147483648
  %v173 = vor.u32 1.1754944e-38, %v172
  %v174 = vsel %vm171, %v173, %v169
  %v175 = vmul.f32 1.0, %v174
  %v176 = vrcp.pop %v160
  %v177 = vmul.f32 %v160, %v176
  %v178 = vsub.f32 1.0, %v177
  %v179 = vmul.f32 %v176, %v178
  %v180 = vadd.f32 %v176, %v179
  %vm181 = vweird.f32 %v160
  %vm182 = vweird.f32 %v176
  %vm183 = vmor %vm181, %vm182
  %v184 = vsel %vm183, %v176, %v180
  %v185 = vand.u32 2147483647, %v160
  %vm186 = vcmp.eq.f32.partialorder %v185, 8.507059e+37
  %v187 = vand.u32 %v160, 2147483648
  %v188 = vor.u32 1.1754944e-38, %v187
  %v189 = vsel %vm186, %v188, %v184
  %v190 = vmul.f32 1.0, %v189
  %v191 = vmul.f32 %v175, 1.0614054
  %v192 = vmul.f32 %v190, 1.0614054
  %v193 = vadd.f32 %v191, -1.4531521
  %v194 = vadd.f32 %v192, -1.4531521
  %v195 = vmul.f32 %v175, %v193
  %v196 = vmul.f32 %v190, %v194
  %v197 = vadd.f32 %v195, 1.4214138
  %v198 = vadd.f32 %v196, 1.4214138
  %v199 = vmul.f32 %v175, %v197
  %v200 = vmul.f32 %v190, %v198
  %v201 = vadd.f32 %v199, -0.28449672
  %v202 = vadd.f32 %v200, -0.28449672
  %v203 = vmul.f32 %v175, %v201
  %v204 = vmul.f32 %v190, %v202
  %v205 = vadd.f32 %v203, 0.2548296
  %v206 = vadd.f32 %v204, 0.2548296
  %v207 = vmul.f32 %v175, %v205
  %v208 = vmul.f32 %v190, %v206
  %v209 = vsub.f32 0.0, %v155
  %v210 = vsub.f32 0.0, %v156
  %v211 = vmul.f32 %v209, %v155
  %v212 = vmul.f32 %v210, %v156
  %v213 = vmul.f32 %v211, 1.442695
  %v214 = vpow.pop %v213
  %v215 = vmul.f32 %v212, 1.442695
  %v216 = vpow.pop %v215
  %v217 = vmul.f32 %v207, %v214
  %v218 = vmul.f32 %v208, %v216
  %v219 = vsub.f32 1.0, %v217
  %v220 = vsub.f32 1.0, %v218
  %vm221 = vcmp.lt.f32.partialorder %v153, 0.0
  %vm222 = vcmp.lt.f32.partialorder %v154, 0.0
  %v223 = vsub.f32 0.0, %v219
  %v224 = vsub.f32 0.0, %v220
  %v225 = vsel %vm221, %v223, %v219
  %v226 = vsel %vm222, %v224, %v220
  %v227 = vadd.f32 %v225, 1.0
  %v228 = vadd.f32 %v226, 1.0
  %v229 = vmul.f32 %v151, %v227
  %v230 = vmul.f32 %v152, %v228
  %vm231 = vcmask 523264
  %232 = vst.msk [vmem:[%s5] sm:$0xff] %vm231, %v229
  %233 = vst.msk [vmem:[%s5 + $0x8] sm:$0xff] %vm231, %v230
  // Predicated region
  $region22: #{cross_transformer.10} parent=0 // pred_check
    _
  $region23: #{cross_transformer.10} parent=0 // pred_check_branch
    %235 = sbr.rel (0) target = $region25
  $region24: #{cross_transformer.10} parent=0 // pred_region
    _
  $region25: #{cross_transformer.10} parent=0 // pred_fallthru
    _
  // Predicated region
  $region26: #{cross_transformer.10} parent=0 // pred_check
    _
  $region27: #{cross_transformer.10} parent=0 // pred_check_branch
    %237 = sbr.rel (0) target = $region29
  $region28: #{cross_transformer.10} parent=0 // pred_region
    _
  $region29: #{cross_transformer.10} parent=0 // pred_fallthru
    _

</llo_original>
